<compile_context>
chip_gen: v6e
topology: v6e:2x2x1
jax: 0.10.0
libtpu: 0.0.40
codegen_flags: <defaults>
</compile_context>

<pallas_src>
import functools
import math

import jax
import jax.numpy as jnp
from jax.experimental import pallas as pl
from jax.experimental.pallas import tpu as pltpu


def _layer_norm(x, gamma, beta, eps):
    mu = jnp.mean(x, axis=-1, keepdims=True)
    var = jnp.mean((x - mu) ** 2, axis=-1, keepdims=True)
    return gamma * (x - mu) * jax.lax.rsqrt(var + eps) + beta


def _gelu(x):
    # TODO(synk): TencentPretrain's default "gelu" is erf-based; erf has no clean
    # Mosaic lowering here, so the tanh approximation is used (~1e-3 difference).
    c = math.sqrt(2.0 / math.pi)
    return 0.5 * x * (1.0 + jnp.tanh(c * (x + 0.044715 * x * x * x)))


def _encoder_kernel(
    bias_ref, x_ref,
    wq_ref, bq_ref, wk_ref, bk_ref, wv_ref, bv_ref, wo_ref, bo_ref,
    g1_ref, be1_ref, w1_ref, b1_ref, w2_ref, b2_ref, g2_ref, be2_ref,
    out_ref,
    *, heads_num, eps):
    layer = pl.program_id(1)

    # Layer 0: seed the resident hidden-state carry.  The output block index is
    # constant over the layer axis, so it stays in VMEM across all L steps and
    # serves as the layer-to-layer carry (written back to HBM once per batch).
    @pl.when(layer == 0)
    def _():
        out_ref[...] = x_ref[...]

    S, H = out_ref.shape[1], out_ref.shape[2]
    dh = H // heads_num
    scale = 1.0 / math.sqrt(dh)

    x = out_ref[0]                                # (S, H) f32 hidden carry
    x_bf = x.astype(jnp.bfloat16)

    # ---- multi-head self-attention: all heads in one batched contraction ----
    q = jnp.dot(x_bf, wq_ref[0], preferred_element_type=jnp.float32) + bq_ref[0]
    k = jnp.dot(x_bf, wk_ref[0], preferred_element_type=jnp.float32) + bk_ref[0]
    v = jnp.dot(x_bf, wv_ref[0], preferred_element_type=jnp.float32) + bv_ref[0]

    q3 = pltpu.einshape("shd->hsd", q.astype(jnp.bfloat16).reshape(S, heads_num, dh))
    k3 = pltpu.einshape("shd->hsd", k.astype(jnp.bfloat16).reshape(S, heads_num, dh))
    v3 = pltpu.einshape("shd->hsd", v.astype(jnp.bfloat16).reshape(S, heads_num, dh))

    scores = jnp.einsum("hqd,hkd->hqk", q3, k3,
                        preferred_element_type=jnp.float32) * scale
    scores = scores + bias_ref[0][None]           # fully_visible additive mask
    scores = scores - jnp.max(scores, axis=-1, keepdims=True)
    e = jnp.exp(scores)
    p = e * pl.reciprocal(jnp.sum(e, axis=-1, keepdims=True), approx=True)

    ctx = jnp.einsum("hqk,hkd->hqd", p.astype(jnp.bfloat16), v3,
                     preferred_element_type=jnp.float32)
    ctx = pltpu.einshape("hsd->shd", ctx).reshape(S, H)

    attn = jnp.dot(ctx.astype(jnp.bfloat16), wo_ref[0],
                   preferred_element_type=jnp.float32) + bo_ref[0]
    inter = _layer_norm(attn + x, g1_ref[0], be1_ref[0], eps)   # post-LN residual

    # ---- feed-forward ----
    h1 = _gelu(jnp.dot(inter.astype(jnp.bfloat16), w1_ref[0],
                       preferred_element_type=jnp.float32) + b1_ref[0])
    ff = jnp.dot(h1.astype(jnp.bfloat16), w2_ref[0],
                 preferred_element_type=jnp.float32) + b2_ref[0]
    out = _layer_norm(ff + inter, g2_ref[0], be2_ref[0], eps)

    out_ref[0] = out.astype(out_ref.dtype)


def transformer_encoder(emb, seg, params, heads_num, eps=1e-6):
    """emb: [B, S, H] float32, seg: [B, S] int32 -> [B, S, H] float32 (post-LN BERT)."""
    B, S, H = emb.shape
    L, _, F = params["w1"].shape

    # fully_visible mask: (1 - (seg > 0)) * -10000, precomputed once per batch row.
    attn_bias = (((seg > 0).astype(jnp.float32) - 1.0) * 10000.0).reshape(B, 1, S)

    weight_names = ["wq", "bq", "wk", "bk", "wv", "bv", "wo", "bo",
                    "ln1_g", "ln1_b", "w1", "b1", "w2", "b2", "ln2_g", "ln2_b"]
    weights = [params[n] for n in weight_names]

    def wspec(arr):
        # Per-layer stacked tensor: block index follows the layer grid axis, so
        # the next layer's block is prefetched while the current layer computes.
        zero_tail = (0,) * (arr.ndim - 1)
        def imap(b, l):
            return (l,) + zero_tail
        return pl.BlockSpec((1,) + arr.shape[1:], imap)

    in_specs = [
        pl.BlockSpec((1, 1, S), lambda b, l: (b, 0, 0)),   # attention bias (per batch)
        pl.BlockSpec((1, S, H), lambda b, l: (b, 0, 0)),   # input hidden (per batch)
    ] + [wspec(w) for w in weights]

    flops = int(B * L * (8 * S * H * H + 4 * S * S * H + 4 * S * H * F))
    transcendentals = int(B * L * (heads_num * S * S + S * F))
    bytes_accessed = int(sum(int(w.nbytes) for w in weights)
                         + 2 * int(emb.nbytes) + int(attn_bias.nbytes))

    kernel = functools.partial(_encoder_kernel, heads_num=heads_num, eps=eps)
    return pl.pallas_call(
        kernel,
        out_shape=jax.ShapeDtypeStruct((B, S, H), emb.dtype),
        grid=(B, L),                           # batch parallel, layer carry innermost
        in_specs=in_specs,
        out_specs=pl.BlockSpec((1, S, H), lambda b, l: (b, 0, 0)),
        compiler_params=pltpu.CompilerParams(
            dimension_semantics=("parallel", "arbitrary"),
            vmem_limit_bytes=64 * 1024 * 1024,
        ),
        cost_estimate=pl.CostEstimate(
            flops=flops, transcendentals=transcendentals,
            bytes_accessed=bytes_accessed),
    )(attn_bias, emb, *weights)


def init_params(key, layers_num, hidden_size, ff_size):
    """Per-layer weights stacked on a leading [L] axis; matrices in bf16, vectors f32."""
    L, H, F = layers_num, hidden_size, ff_size
    k = jax.random.split(key, 6)
    w = lambda kk, shp: (jax.random.normal(kk, shp, jnp.float32) * 0.02).astype(jnp.bfloat16)
    zeros = lambda shp: jnp.zeros(shp, jnp.float32)
    ones = lambda shp: jnp.ones(shp, jnp.float32)
    return dict(
        wq=w(k[0], (L, H, H)), bq=zeros((L, 1, H)),
        wk=w(k[1], (L, H, H)), bk=zeros((L, 1, H)),
        wv=w(k[2], (L, H, H)), bv=zeros((L, 1, H)),
        wo=w(k[3], (L, H, H)), bo=zeros((L, 1, H)),
        ln1_g=ones((L, 1, H)), ln1_b=zeros((L, 1, H)),
        w1=w(k[4], (L, H, F)), b1=zeros((L, 1, F)),
        w2=w(k[5], (L, F, H)), b2=zeros((L, 1, H)),
        ln2_g=ones((L, 1, H)), ln2_b=zeros((L, 1, H)),
    )


if __name__ == "__main__":
    B, S, H = 2, 8, 32           # batch, seq_length, hidden_size
    heads_num, F, L = 4, 128, 2  # heads, feedforward_size, layers_num

    key = jax.random.PRNGKey(0)
    k_emb, k_w = jax.random.split(key)
    emb = jax.random.normal(k_emb, (B, S, H), jnp.float32)
    # seg: first example has 2 padding tokens, second is fully valid.
    seg = jnp.array([[1, 1, 1, 1, 1, 1, 0, 0],
                     [1, 1, 1, 1, 2, 2, 2, 2]], jnp.int32)

    params = init_params(k_w, L, H, F)
    out = transformer_encoder(emb, seg, params, heads_num)
    out = jax.block_until_ready(out)
    assert out.shape == (B, S, H) and out.dtype == jnp.float32
    print("KERNEL_OK")
</pallas_src>

<mosaic_0001>
module attributes {stable_mosaic.version = 11 : i64} {
  func.func @_encoder_kernel(%arg0: i32, %arg1: i32, %arg2: memref<1x1x8xf32, #tpu.memory_space<vmem>>, %arg3: memref<1x8x32xf32, #tpu.memory_space<vmem>>, %arg4: memref<1x32x32xbf16, #tpu.memory_space<vmem>>, %arg5: memref<1x1x32xf32, #tpu.memory_space<vmem>>, %arg6: memref<1x32x32xbf16, #tpu.memory_space<vmem>>, %arg7: memref<1x1x32xf32, #tpu.memory_space<vmem>>, %arg8: memref<1x32x32xbf16, #tpu.memory_space<vmem>>, %arg9: memref<1x1x32xf32, #tpu.memory_space<vmem>>, %arg10: memref<1x32x32xbf16, #tpu.memory_space<vmem>>, %arg11: memref<1x1x32xf32, #tpu.memory_space<vmem>>, %arg12: memref<1x1x32xf32, #tpu.memory_space<vmem>>, %arg13: memref<1x1x32xf32, #tpu.memory_space<vmem>>, %arg14: memref<1x32x128xbf16, #tpu.memory_space<vmem>>, %arg15: memref<1x1x128xf32, #tpu.memory_space<vmem>>, %arg16: memref<1x128x32xbf16, #tpu.memory_space<vmem>>, %arg17: memref<1x1x32xf32, #tpu.memory_space<vmem>>, %arg18: memref<1x1x32xf32, #tpu.memory_space<vmem>>, %arg19: memref<1x1x32xf32, #tpu.memory_space<vmem>>, %arg20: memref<1x8x32xf32, #tpu.memory_space<vmem>>) attributes {dimension_semantics = [#tpu.dimension_semantics<parallel>, #tpu.dimension_semantics<arbitrary>], iteration_bounds = array<i64: 2, 2>, scalar_prefetch = 0 : i64, scratch_operands = 0 : i64, tpu.core_type = #tpu.core_type<tc>, window_params = [{transform_indices = @transform_0, window_bounds = array<i64: 1, 1, 8>}, {transform_indices = @transform_1, window_bounds = array<i64: 1, 8, 32>}, {transform_indices = @transform_2, window_bounds = array<i64: 1, 32, 32>}, {transform_indices = @transform_3, window_bounds = array<i64: 1, 1, 32>}, {transform_indices = @transform_4, window_bounds = array<i64: 1, 32, 32>}, {transform_indices = @transform_5, window_bounds = array<i64: 1, 1, 32>}, {transform_indices = @transform_6, window_bounds = array<i64: 1, 32, 32>}, {transform_indices = @transform_7, window_bounds = array<i64: 1, 1, 32>}, {transform_indices = @transform_8, window_bounds = array<i64: 1, 32, 32>}, {transform_indices = @transform_9, window_bounds = array<i64: 1, 1, 32>}, {transform_indices = @transform_10, window_bounds = array<i64: 1, 1, 32>}, {transform_indices = @transform_11, window_bounds = array<i64: 1, 1, 32>}, {transform_indices = @transform_12, window_bounds = array<i64: 1, 32, 128>}, {transform_indices = @transform_13, window_bounds = array<i64: 1, 1, 128>}, {transform_indices = @transform_14, window_bounds = array<i64: 1, 128, 32>}, {transform_indices = @transform_15, window_bounds = array<i64: 1, 1, 32>}, {transform_indices = @transform_16, window_bounds = array<i64: 1, 1, 32>}, {transform_indices = @transform_17, window_bounds = array<i64: 1, 1, 32>}, {transform_indices = @transform_18, window_bounds = array<i64: 1, 8, 32>}]} {
    %c0_i32 = arith.constant 0 : i32
    %0 = arith.cmpi eq, %arg1, %c0_i32 : i32
    %1 = arith.extui %0 : i1 to i32
    %c0_i32_0 = arith.constant 0 : i32
    %2 = arith.cmpi ne, %1, %c0_i32_0 : i32
    scf.if %2 {
      %c0_81 = arith.constant 0 : index
      %c0_82 = arith.constant 0 : index
      %c0_83 = arith.constant 0 : index
      %152 = vector.load %arg3[%c0_81, %c0_82, %c0_83] : memref<1x8x32xf32, #tpu.memory_space<vmem>>, vector<1x8x32xf32>
      %c0_84 = arith.constant 0 : index
      %c0_85 = arith.constant 0 : index
      %c0_86 = arith.constant 0 : index
      %153 = vector.load %arg20[%c0_84, %c0_85, %c0_86] : memref<1x8x32xf32, #tpu.memory_space<vmem>>, vector<1x8x32xf32>
      tpu.vector_store %arg20[%c0_84, %c0_85, %c0_86], %152 {strides = array<i32>} : memref<1x8x32xf32, #tpu.memory_space<vmem>>, vector<1x8x32xf32>,
    } else {
    }
    %c0 = arith.constant 0 : index
    %c0_1 = arith.constant 0 : index
    %c0_2 = arith.constant 0 : index
    %3 = vector.load %arg20[%c0, %c0_1, %c0_2] : memref<1x8x32xf32, #tpu.memory_space<vmem>>, vector<1x8x32xf32>
    %4 = vector.shape_cast %3 : vector<1x8x32xf32> to vector<8x32xf32>
    %5 = arith.truncf %4 : vector<8x32xf32> to vector<8x32xbf16>
    %c0_3 = arith.constant 0 : index
    %c0_4 = arith.constant 0 : index
    %c0_5 = arith.constant 0 : index
    %6 = vector.load %arg4[%c0_3, %c0_4, %c0_5] : memref<1x32x32xbf16, #tpu.memory_space<vmem>>, vector<1x32x32xbf16>
    %7 = vector.shape_cast %6 : vector<1x32x32xbf16> to vector<32x32xbf16>
    %cst = arith.constant dense<0.000000e+00> : vector<8x32xf32>
    %8 = tpu.matmul %5, %7, %cst {dimension_numbers = #tpu.dot_dimension_numbers<[1], [0], [0], [1], [0, 0, 1, 1], [], []>} : vector<8x32xbf16>, vector<32x32xbf16>, vector<8x32xf32> -> vector<8x32xf32>
    %c0_6 = arith.constant 0 : index
    %c0_7 = arith.constant 0 : index
    %c0_8 = arith.constant 0 : index
    %9 = vector.load %arg5[%c0_6, %c0_7, %c0_8] : memref<1x1x32xf32, #tpu.memory_space<vmem>>, vector<1x1x32xf32>
    %10 = vector.shape_cast %9 : vector<1x1x32xf32> to vector<1x32xf32>
    %11 = vector.broadcast %10 : vector<1x32xf32> to vector<8x32xf32>
    %12 = arith.addf %8, %11 : vector<8x32xf32>
    %c0_9 = arith.constant 0 : index
    %c0_10 = arith.constant 0 : index
    %c0_11 = arith.constant 0 : index
    %13 = vector.load %arg6[%c0_9, %c0_10, %c0_11] : memref<1x32x32xbf16, #tpu.memory_space<vmem>>, vector<1x32x32xbf16>
    %14 = vector.shape_cast %13 : vector<1x32x32xbf16> to vector<32x32xbf16>
    %cst_12 = arith.constant dense<0.000000e+00> : vector<8x32xf32>
    %15 = tpu.matmul %5, %14, %cst_12 {dimension_numbers = #tpu.dot_dimension_numbers<[1], [0], [0], [1], [0, 0, 1, 1], [], []>} : vector<8x32xbf16>, vector<32x32xbf16>, vector<8x32xf32> -> vector<8x32xf32>
    %c0_13 = arith.constant 0 : index
    %c0_14 = arith.constant 0 : index
    %c0_15 = arith.constant 0 : index
    %16 = vector.load %arg7[%c0_13, %c0_14, %c0_15] : memref<1x1x32xf32, #tpu.memory_space<vmem>>, vector<1x1x32xf32>
    %17 = vector.shape_cast %16 : vector<1x1x32xf32> to vector<1x32xf32>
    %18 = vector.broadcast %17 : vector<1x32xf32> to vector<8x32xf32>
    %19 = arith.addf %15, %18 : vector<8x32xf32>
    %c0_16 = arith.constant 0 : index
    %c0_17 = arith.constant 0 : index
    %c0_18 = arith.constant 0 : index
    %20 = vector.load %arg8[%c0_16, %c0_17, %c0_18] : memref<1x32x32xbf16, #tpu.memory_space<vmem>>, vector<1x32x32xbf16>
    %21 = vector.shape_cast %20 : vector<1x32x32xbf16> to vector<32x32xbf16>
    %cst_19 = arith.constant dense<0.000000e+00> : vector<8x32xf32>
    %22 = tpu.matmul %5, %21, %cst_19 {dimension_numbers = #tpu.dot_dimension_numbers<[1], [0], [0], [1], [0, 0, 1, 1], [], []>} : vector<8x32xbf16>, vector<32x32xbf16>, vector<8x32xf32> -> vector<8x32xf32>
    %c0_20 = arith.constant 0 : index
    %c0_21 = arith.constant 0 : index
    %c0_22 = arith.constant 0 : index
    %23 = vector.load %arg9[%c0_20, %c0_21, %c0_22] : memref<1x1x32xf32, #tpu.memory_space<vmem>>, vector<1x1x32xf32>
    %24 = vector.shape_cast %23 : vector<1x1x32xf32> to vector<1x32xf32>
    %25 = vector.broadcast %24 : vector<1x32xf32> to vector<8x32xf32>
    %26 = arith.addf %22, %25 : vector<8x32xf32>
    %27 = arith.truncf %12 : vector<8x32xf32> to vector<8x32xbf16>
    %28 = vector.shape_cast %27 : vector<8x32xbf16> to vector<8x4x8xbf16>
    %29 = tpu.transpose %28, [1, 0, 2] : vector<8x4x8xbf16> -> vector<4x8x8xbf16>
    %30 = arith.truncf %19 : vector<8x32xf32> to vector<8x32xbf16>
    %31 = vector.shape_cast %30 : vector<8x32xbf16> to vector<8x4x8xbf16>
    %32 = tpu.transpose %31, [1, 0, 2] : vector<8x4x8xbf16> -> vector<4x8x8xbf16>
    %33 = arith.truncf %26 : vector<8x32xf32> to vector<8x32xbf16>
    %34 = vector.shape_cast %33 : vector<8x32xbf16> to vector<8x4x8xbf16>
    %35 = tpu.transpose %34, [1, 0, 2] : vector<8x4x8xbf16> -> vector<4x8x8xbf16>
    "tpu.trace_start"() <{level = 10 : i32, message = "hqd,hkd->hqk"}> : () -> ()
    %cst_23 = arith.constant dense<0.000000e+00> : vector<4x8x8xf32>
    %36 = tpu.matmul %29, %32, %cst_23 {dimension_numbers = #tpu.dot_dimension_numbers<[2], [2], [1], [1], [0, 0, 0, 1, 1, 1], [0], [0]>} : vector<4x8x8xbf16>, vector<4x8x8xbf16>, vector<4x8x8xf32> -> vector<4x8x8xf32>
    "tpu.trace_stop"() : () -> ()
    %cst_24 = arith.constant 0.353553385 : f32
    %37 = vector.broadcast %cst_24 : f32 to vector<4x8x8xf32>
    %38 = arith.mulf %36, %37 : vector<4x8x8xf32>
    %c0_25 = arith.constant 0 : index
    %c0_26 = arith.constant 0 : index
    %c0_27 = arith.constant 0 : index
    %39 = vector.load %arg2[%c0_25, %c0_26, %c0_27] : memref<1x1x8xf32, #tpu.memory_space<vmem>>, vector<1x1x8xf32>
    %40 = vector.shape_cast %39 : vector<1x1x8xf32> to vector<1x8xf32>
    %41 = vector.shape_cast %40 : vector<1x8xf32> to vector<1x1x8xf32>
    %42 = vector.broadcast %41 : vector<1x1x8xf32> to vector<4x8x8xf32>
    %43 = arith.addf %38, %42 : vector<4x8x8xf32>
    %cst_28 = arith.constant dense<0xFF800000> : vector<4x8xf32>
    %44 = vector.multi_reduction <maximumf>, %43, %cst_28 [2] : vector<4x8x8xf32> to vector<4x8xf32>
    %45 = vector.shape_cast %44 : vector<4x8xf32> to vector<4x8x1xf32>
    %46 = vector.broadcast %45 : vector<4x8x1xf32> to vector<4x8x8xf32>
    %47 = arith.subf %43, %46 : vector<4x8x8xf32>
    %48 = math.exp %47 : vector<4x8x8xf32>
    %cst_29 = arith.constant dense<0.000000e+00> : vector<4x8xf32>
    %49 = vector.multi_reduction <add>, %48, %cst_29 [2] : vector<4x8x8xf32> to vector<4x8xf32>
    %50 = vector.shape_cast %49 : vector<4x8xf32> to vector<4x8x1xf32>
    %51 = tpu.reciprocal %50 {approx = true} : vector<4x8x1xf32> -> vector<4x8x1xf32>
    %52 = vector.broadcast %51 : vector<4x8x1xf32> to vector<4x8x8xf32>
    %53 = arith.mulf %48, %52 : vector<4x8x8xf32>
    %54 = arith.truncf %53 : vector<4x8x8xf32> to vector<4x8x8xbf16>
    "tpu.trace_start"() <{level = 10 : i32, message = "hqk,hkd->hqd"}> : () -> ()
    %cst_30 = arith.constant dense<0.000000e+00> : vector<4x8x8xf32>
    %55 = tpu.matmul %54, %35, %cst_30 {dimension_numbers = #tpu.dot_dimension_numbers<[2], [1], [1], [2], [0, 0, 0, 1, 1, 2], [0], [0]>} : vector<4x8x8xbf16>, vector<4x8x8xbf16>, vector<4x8x8xf32> -> vector<4x8x8xf32>
    "tpu.trace_stop"() : () -> ()
    %56 = tpu.transpose %55, [1, 0, 2] : vector<4x8x8xf32> -> vector<8x4x8xf32>
    %57 = vector.shape_cast %56 : vector<8x4x8xf32> to vector<8x32xf32>
    %58 = arith.truncf %57 : vector<8x32xf32> to vector<8x32xbf16>
    %c0_31 = arith.constant 0 : index
    %c0_32 = arith.constant 0 : index
    %c0_33 = arith.constant 0 : index
    %59 = vector.load %arg10[%c0_31, %c0_32, %c0_33] : memref<1x32x32xbf16, #tpu.memory_space<vmem>>, vector<1x32x32xbf16>
    %60 = vector.shape_cast %59 : vector<1x32x32xbf16> to vector<32x32xbf16>
    %cst_34 = arith.constant dense<0.000000e+00> : vector<8x32xf32>
    %61 = tpu.matmul %58, %60, %cst_34 {dimension_numbers = #tpu.dot_dimension_numbers<[1], [0], [0], [1], [0, 0, 1, 1], [], []>} : vector<8x32xbf16>, vector<32x32xbf16>, vector<8x32xf32> -> vector<8x32xf32>
    %c0_35 = arith.constant 0 : index
    %c0_36 = arith.constant 0 : index
    %c0_37 = arith.constant 0 : index
    %62 = vector.load %arg11[%c0_35, %c0_36, %c0_37] : memref<1x1x32xf32, #tpu.memory_space<vmem>>, vector<1x1x32xf32>
    %63 = vector.shape_cast %62 : vector<1x1x32xf32> to vector<1x32xf32>
    %64 = vector.broadcast %63 : vector<1x32xf32> to vector<8x32xf32>
    %65 = arith.addf %61, %64 : vector<8x32xf32>
    %66 = arith.addf %65, %4 : vector<8x32xf32>
    %c0_38 = arith.constant 0 : index
    %c0_39 = arith.constant 0 : index
    %c0_40 = arith.constant 0 : index
    %67 = vector.load %arg12[%c0_38, %c0_39, %c0_40] : memref<1x1x32xf32, #tpu.memory_space<vmem>>, vector<1x1x32xf32>
    %68 = vector.shape_cast %67 : vector<1x1x32xf32> to vector<1x32xf32>
    %c0_41 = arith.constant 0 : index
    %c0_42 = arith.constant 0 : index
    %c0_43 = arith.constant 0 : index
    %69 = vector.load %arg13[%c0_41, %c0_42, %c0_43] : memref<1x1x32xf32, #tpu.memory_space<vmem>>, vector<1x1x32xf32>
    %70 = vector.shape_cast %69 : vector<1x1x32xf32> to vector<1x32xf32>
    %cst_44 = arith.constant dense<0.000000e+00> : vector<8xf32>
    %71 = vector.multi_reduction <add>, %66, %cst_44 [1] : vector<8x32xf32> to vector<8xf32>
    %72 = vector.shape_cast %71 : vector<8xf32> to vector<8x1xf32>
    %cst_45 = arith.constant 3.200000e+01 : f32
    %73 = vector.broadcast %cst_45 : f32 to vector<8x1xf32>
    %74 = arith.divf %72, %73 : vector<8x1xf32>
    %75 = vector.broadcast %74 : vector<8x1xf32> to vector<8x32xf32>
    %76 = arith.subf %66, %75 : vector<8x32xf32>
    %77 = arith.mulf %76, %76 : vector<8x32xf32>
    %cst_46 = arith.constant dense<0.000000e+00> : vector<8xf32>
    %78 = vector.multi_reduction <add>, %77, %cst_46 [1] : vector<8x32xf32> to vector<8xf32>
    %79 = vector.shape_cast %78 : vector<8xf32> to vector<8x1xf32>
    %cst_47 = arith.constant 3.200000e+01 : f32
    %80 = vector.broadcast %cst_47 : f32 to vector<8x1xf32>
    %81 = arith.divf %79, %80 : vector<8x1xf32>
    %82 = vector.broadcast %74 : vector<8x1xf32> to vector<8x32xf32>
    %83 = arith.subf %66, %82 : vector<8x32xf32>
    %84 = vector.broadcast %68 : vector<1x32xf32> to vector<8x32xf32>
    %85 = arith.mulf %84, %83 : vector<8x32xf32>
    %cst_48 = arith.constant 9.99999997E-7 : f32
    %86 = vector.broadcast %cst_48 : f32 to vector<8x1xf32>
    %87 = arith.addf %81, %86 : vector<8x1xf32>
    %88 = math.rsqrt %87 : vector<8x1xf32>
    %89 = vector.broadcast %88 : vector<8x1xf32> to vector<8x32xf32>
    %90 = arith.mulf %85, %89 : vector<8x32xf32>
    %91 = vector.broadcast %70 : vector<1x32xf32> to vector<8x32xf32>
    %92 = arith.addf %90, %91 : vector<8x32xf32>
    %93 = arith.truncf %92 : vector<8x32xf32> to vector<8x32xbf16>
    %c0_49 = arith.constant 0 : index
    %c0_50 = arith.constant 0 : index
    %c0_51 = arith.constant 0 : index
    %94 = vector.load %arg14[%c0_49, %c0_50, %c0_51] : memref<1x32x128xbf16, #tpu.memory_space<vmem>>, vector<1x32x128xbf16>
    %95 = vector.shape_cast %94 : vector<1x32x128xbf16> to vector<32x128xbf16>
    %cst_52 = arith.constant dense<0.000000e+00> : vector<8x128xf32>
    %96 = tpu.matmul %93, %95, %cst_52 {dimension_numbers = #tpu.dot_dimension_numbers<[1], [0], [0], [1], [0, 0, 1, 1], [], []>} : vector<8x32xbf16>, vector<32x128xbf16>, vector<8x128xf32> -> vector<8x128xf32>
    %c0_53 = arith.constant 0 : index
    %c0_54 = arith.constant 0 : index
    %c0_55 = arith.constant 0 : index
    %97 = vector.load %arg15[%c0_53, %c0_54, %c0_55] : memref<1x1x128xf32, #tpu.memory_space<vmem>>, vector<1x1x128xf32>
    %98 = vector.shape_cast %97 : vector<1x1x128xf32> to vector<1x128xf32>
    %99 = vector.broadcast %98 : vector<1x128xf32> to vector<8x128xf32>
    %100 = arith.addf %96, %99 : vector<8x128xf32>
    %cst_56 = arith.constant 5.000000e-01 : f32
    %101 = vector.broadcast %cst_56 : f32 to vector<8x128xf32>
    %102 = arith.mulf %101, %100 : vector<8x128xf32>
    %cst_57 = arith.constant 4.471500e-02 : f32
    %103 = vector.broadcast %cst_57 : f32 to vector<8x128xf32>
    %104 = arith.mulf %103, %100 : vector<8x128xf32>
    %105 = arith.mulf %104, %100 : vector<8x128xf32>
    %106 = arith.mulf %105, %100 : vector<8x128xf32>
    %107 = arith.addf %100, %106 : vector<8x128xf32>
    %cst_58 = arith.constant 0.797884583 : f32
    %108 = vector.broadcast %cst_58 : f32 to vector<8x128xf32>
    %109 = arith.mulf %108, %107 : vector<8x128xf32>
    %110 = math.tanh %109 : vector<8x128xf32>
    %cst_59 = arith.constant 1.000000e+00 : f32
    %111 = vector.broadcast %cst_59 : f32 to vector<8x128xf32>
    %112 = arith.addf %111, %110 : vector<8x128xf32>
    %113 = arith.mulf %102, %112 : vector<8x128xf32>
    %114 = arith.truncf %113 : vector<8x128xf32> to vector<8x128xbf16>
    %c0_60 = arith.constant 0 : index
    %c0_61 = arith.constant 0 : index
    %c0_62 = arith.constant 0 : index
    %115 = vector.load %arg16[%c0_60, %c0_61, %c0_62] : memref<1x128x32xbf16, #tpu.memory_space<vmem>>, vector<1x128x32xbf16>
    %116 = vector.shape_cast %115 : vector<1x128x32xbf16> to vector<128x32xbf16>
    %cst_63 = arith.constant dense<0.000000e+00> : vector<8x32xf32>
    %117 = tpu.matmul %114, %116, %cst_63 {dimension_numbers = #tpu.dot_dimension_numbers<[1], [0], [0], [1], [0, 0, 1, 1], [], []>} : vector<8x128xbf16>, vector<128x32xbf16>, vector<8x32xf32> -> vector<8x32xf32>
    %c0_64 = arith.constant 0 : index
    %c0_65 = arith.constant 0 : index
    %c0_66 = arith.constant 0 : index
    %118 = vector.load %arg17[%c0_64, %c0_65, %c0_66] : memref<1x1x32xf32, #tpu.memory_space<vmem>>, vector<1x1x32xf32>
    %119 = vector.shape_cast %118 : vector<1x1x32xf32> to vector<1x32xf32>
    %120 = vector.broadcast %119 : vector<1x32xf32> to vector<8x32xf32>
    %121 = arith.addf %117, %120 : vector<8x32xf32>
    %122 = arith.addf %121, %92 : vector<8x32xf32>
    %c0_67 = arith.constant 0 : index
    %c0_68 = arith.constant 0 : index
    %c0_69 = arith.constant 0 : index
    %123 = vector.load %arg18[%c0_67, %c0_68, %c0_69] : memref<1x1x32xf32, #tpu.memory_space<vmem>>, vector<1x1x32xf32>
    %124 = vector.shape_cast %123 : vector<1x1x32xf32> to vector<1x32xf32>
    %c0_70 = arith.constant 0 : index
    %c0_71 = arith.constant 0 : index
    %c0_72 = arith.constant 0 : index
    %125 = vector.load %arg19[%c0_70, %c0_71, %c0_72] : memref<1x1x32xf32, #tpu.memory_space<vmem>>, vector<1x1x32xf32>
    %126 = vector.shape_cast %125 : vector<1x1x32xf32> to vector<1x32xf32>
    %cst_73 = arith.constant dense<0.000000e+00> : vector<8xf32>
    %127 = vector.multi_reduction <add>, %122, %cst_73 [1] : vector<8x32xf32> to vector<8xf32>
    %128 = vector.shape_cast %127 : vector<8xf32> to vector<8x1xf32>
    %cst_74 = arith.constant 3.200000e+01 : f32
    %129 = vector.broadcast %cst_74 : f32 to vector<8x1xf32>
    %130 = arith.divf %128, %129 : vector<8x1xf32>
    %131 = vector.broadcast %130 : vector<8x1xf32> to vector<8x32xf32>
    %132 = arith.subf %122, %131 : vector<8x32xf32>
    %133 = arith.mulf %132, %132 : vector<8x32xf32>
    %cst_75 = arith.constant dense<0.000000e+00> : vector<8xf32>
    %134 = vector.multi_reduction <add>, %133, %cst_75 [1] : vector<8x32xf32> to vector<8xf32>
    %135 = vector.shape_cast %134 : vector<8xf32> to vector<8x1xf32>
    %cst_76 = arith.constant 3.200000e+01 : f32
    %136 = vector.broadcast %cst_76 : f32 to vector<8x1xf32>
    %137 = arith.divf %135, %136 : vector<8x1xf32>
    %138 = vector.broadcast %130 : vector<8x1xf32> to vector<8x32xf32>
    %139 = arith.subf %122, %138 : vector<8x32xf32>
    %140 = vector.broadcast %124 : vector<1x32xf32> to vector<8x32xf32>
    %141 = arith.mulf %140, %139 : vector<8x32xf32>
    %cst_77 = arith.constant 9.99999997E-7 : f32
    %142 = vector.broadcast %cst_77 : f32 to vector<8x1xf32>
    %143 = arith.addf %137, %142 : vector<8x1xf32>
    %144 = math.rsqrt %143 : vector<8x1xf32>
    %145 = vector.broadcast %144 : vector<8x1xf32> to vector<8x32xf32>
    %146 = arith.mulf %141, %145 : vector<8x32xf32>
    %147 = vector.broadcast %126 : vector<1x32xf32> to vector<8x32xf32>
    %148 = arith.addf %146, %147 : vector<8x32xf32>
    %c0_78 = arith.constant 0 : index
    %c0_79 = arith.constant 0 : index
    %c0_80 = arith.constant 0 : index
    %149 = vector.load %arg20[%c0_78, %c0_79, %c0_80] : memref<1x8x32xf32, #tpu.memory_space<vmem>>, vector<1x8x32xf32>
    %150 = vector.shape_cast %149 : vector<1x8x32xf32> to vector<8x32xf32>
    %151 = vector.shape_cast %148 : vector<8x32xf32> to vector<1x8x32xf32>
    tpu.vector_store %arg20[%c0_78, %c0_79, %c0_80], %151 {strides = array<i32>} : memref<1x8x32xf32, #tpu.memory_space<vmem>>, vector<1x8x32xf32>,
    return
  }
  func.func @transform_0(%arg0: i32, %arg1: i32) -> (i32, i32, i32) {
    %c0_i32 = arith.constant 0 : i32
    %c0_i32_0 = arith.constant 0 : i32
    %c0_i32_1 = arith.constant 0 : i32
    return %arg0, %c0_i32, %c0_i32_0 : i32, i32, i32
  }
  func.func @transform_1(%arg0: i32, %arg1: i32) -> (i32, i32, i32) {
    %c0_i32 = arith.constant 0 : i32
    %c0_i32_0 = arith.constant 0 : i32
    %c0_i32_1 = arith.constant 0 : i32
    return %arg0, %c0_i32, %c0_i32_0 : i32, i32, i32
  }
  func.func @transform_2(%arg0: i32, %arg1: i32) -> (i32, i32, i32) {
    %c0_i32 = arith.constant 0 : i32
    %c0_i32_0 = arith.constant 0 : i32
    %c0_i32_1 = arith.constant 0 : i32
    return %arg1, %c0_i32, %c0_i32_0 : i32, i32, i32
  }
  func.func @transform_3(%arg0: i32, %arg1: i32) -> (i32, i32, i32) {
    %c0_i32 = arith.constant 0 : i32
    %c0_i32_0 = arith.constant 0 : i32
    %c0_i32_1 = arith.constant 0 : i32
    return %arg1, %c0_i32, %c0_i32_0 : i32, i32, i32
  }
  func.func @transform_4(%arg0: i32, %arg1: i32) -> (i32, i32, i32) {
    %c0_i32 = arith.constant 0 : i32
    %c0_i32_0 = arith.constant 0 : i32
    %c0_i32_1 = arith.constant 0 : i32
    return %arg1, %c0_i32, %c0_i32_0 : i32, i32, i32
  }
  func.func @transform_5(%arg0: i32, %arg1: i32) -> (i32, i32, i32) {
    %c0_i32 = arith.constant 0 : i32
    %c0_i32_0 = arith.constant 0 : i32
    %c0_i32_1 = arith.constant 0 : i32
    return %arg1, %c0_i32, %c0_i32_0 : i32, i32, i32
  }
  func.func @transform_6(%arg0: i32, %arg1: i32) -> (i32, i32, i32) {
    %c0_i32 = arith.constant 0 : i32
    %c0_i32_0 = arith.constant 0 : i32
    %c0_i32_1 = arith.constant 0 : i32
    return %arg1, %c0_i32, %c0_i32_0 : i32, i32, i32
  }
  func.func @transform_7(%arg0: i32, %arg1: i32) -> (i32, i32, i32) {
    %c0_i32 = arith.constant 0 : i32
    %c0_i32_0 = arith.constant 0 : i32
    %c0_i32_1 = arith.constant 0 : i32
    return %arg1, %c0_i32, %c0_i32_0 : i32, i32, i32
  }
  func.func @transform_8(%arg0: i32, %arg1: i32) -> (i32, i32, i32) {
    %c0_i32 = arith.constant 0 : i32
    %c0_i32_0 = arith.constant 0 : i32
    %c0_i32_1 = arith.constant 0 : i32
    return %arg1, %c0_i32, %c0_i32_0 : i32, i32, i32
  }
  func.func @transform_9(%arg0: i32, %arg1: i32) -> (i32, i32, i32) {
    %c0_i32 = arith.constant 0 : i32
    %c0_i32_0 = arith.constant 0 : i32
    %c0_i32_1 = arith.constant 0 : i32
    return %arg1, %c0_i32, %c0_i32_0 : i32, i32, i32
  }
  func.func @transform_10(%arg0: i32, %arg1: i32) -> (i32, i32, i32) {
    %c0_i32 = arith.constant 0 : i32
    %c0_i32_0 = arith.constant 0 : i32
    %c0_i32_1 = arith.constant 0 : i32
    return %arg1, %c0_i32, %c0_i32_0 : i32, i32, i32
  }
  func.func @transform_11(%arg0: i32, %arg1: i32) -> (i32, i32, i32) {
    %c0_i32 = arith.constant 0 : i32
    %c0_i32_0 = arith.constant 0 : i32
    %c0_i32_1 = arith.constant 0 : i32
    return %arg1, %c0_i32, %c0_i32_0 : i32, i32, i32
  }
  func.func @transform_12(%arg0: i32, %arg1: i32) -> (i32, i32, i32) {
    %c0_i32 = arith.constant 0 : i32
    %c0_i32_0 = arith.constant 0 : i32
    %c0_i32_1 = arith.constant 0 : i32
    return %arg1, %c0_i32, %c0_i32_0 : i32, i32, i32
  }
  func.func @transform_13(%arg0: i32, %arg1: i32) -> (i32, i32, i32) {
    %c0_i32 = arith.constant 0 : i32
    %c0_i32_0 = arith.constant 0 : i32
    %c0_i32_1 = arith.constant 0 : i32
    return %arg1, %c0_i32, %c0_i32_0 : i32, i32, i32
  }
  func.func @transform_14(%arg0: i32, %arg1: i32) -> (i32, i32, i32) {
    %c0_i32 = arith.constant 0 : i32
    %c0_i32_0 = arith.constant 0 : i32
    %c0_i32_1 = arith.constant 0 : i32
    return %arg1, %c0_i32, %c0_i32_0 : i32, i32, i32
  }
  func.func @transform_15(%arg0: i32, %arg1: i32) -> (i32, i32, i32) {
    %c0_i32 = arith.constant 0 : i32
    %c0_i32_0 = arith.constant 0 : i32
    %c0_i32_1 = arith.constant 0 : i32
    return %arg1, %c0_i32, %c0_i32_0 : i32, i32, i32
  }
  func.func @transform_16(%arg0: i32, %arg1: i32) -> (i32, i32, i32) {
    %c0_i32 = arith.constant 0 : i32
    %c0_i32_0 = arith.constant 0 : i32
    %c0_i32_1 = arith.constant 0 : i32
    return %arg1, %c0_i32, %c0_i32_0 : i32, i32, i32
  }
  func.func @transform_17(%arg0: i32, %arg1: i32) -> (i32, i32, i32) {
    %c0_i32 = arith.constant 0 : i32
    %c0_i32_0 = arith.constant 0 : i32
    %c0_i32_1 = arith.constant 0 : i32
    return %arg1, %c0_i32, %c0_i32_0 : i32, i32, i32
  }
  func.func @transform_18(%arg0: i32, %arg1: i32) -> (i32, i32, i32) {
    %c0_i32 = arith.constant 0 : i32
    %c0_i32_0 = arith.constant 0 : i32
    %c0_i32_1 = arith.constant 0 : i32
    return %arg0, %c0_i32, %c0_i32_0 : i32, i32, i32
  }
}

</mosaic_0001>

<llo_original>
// kernel: tpu_custom_call.1
$region0: #{tpu_custom_call.1}
  #allocation0 [shape = 'u32[]', space=smem, size = 0x4, offset = 0x4, fixed_abs, tag = 'smem constant byte address 0x4 - core index']
  #allocation1 [shape = 'u32[144,128]{1,0:T(1,128)}', space=vmem, size = 0x12000, scoped, tag = 'internal scratch']
  %s0 = inlined_call_operand.hbm [shape: f32[2,1,8], index: 0, kind: input, shape index: {}]
  %s1 = inlined_call_operand.hbm [shape: f32[2,8,32], index: 1, kind: input, shape index: {}]
  %s2 = inlined_call_operand.vmem [shape: bf16[2,32,32], index: 2, kind: input, shape index: {}]
  %s3 = inlined_call_operand.vmem [shape: f32[2,1,32], index: 3, kind: input, shape index: {}]
  %s4 = inlined_call_operand.vmem [shape: bf16[2,32,32], index: 4, kind: input, shape index: {}]
  %s5 = inlined_call_operand.vmem [shape: f32[2,1,32], index: 5, kind: input, shape index: {}]
  %s6 = inlined_call_operand.vmem [shape: bf16[2,32,32], index: 6, kind: input, shape index: {}]
  %s7 = inlined_call_operand.vmem [shape: f32[2,1,32], index: 7, kind: input, shape index: {}]
  %s8 = inlined_call_operand.vmem [shape: bf16[2,32,32], index: 8, kind: input, shape index: {}]
  %s9 = inlined_call_operand.vmem [shape: f32[2,1,32], index: 9, kind: input, shape index: {}]
  %s10 = inlined_call_operand.vmem [shape: f32[2,1,32], index: 10, kind: input, shape index: {}]
  %s11 = inlined_call_operand.vmem [shape: f32[2,1,32], index: 11, kind: input, shape index: {}]
  %s12 = inlined_call_operand.vmem [shape: bf16[2,32,128], index: 12, kind: input, shape index: {}]
  %s13 = inlined_call_operand.vmem [shape: f32[2,1,128], index: 13, kind: input, shape index: {}]
  %s14 = inlined_call_operand.vmem [shape: bf16[2,128,32], index: 14, kind: input, shape index: {}]
  %s15 = inlined_call_operand.vmem [shape: f32[2,1,32], index: 15, kind: input, shape index: {}]
  %s16 = inlined_call_operand.vmem [shape: f32[2,1,32], index: 16, kind: input, shape index: {}]
  %s17 = inlined_call_operand.vmem [shape: f32[2,1,32], index: 17, kind: input, shape index: {}]
  %s18 = inlined_call_operand.hbm [shape: f32[2,8,32], index: 18, kind: output, shape index: {}]
  %s19 = sld [smem:[#allocation0]]
  $region117: #{tpu_custom_call.1} parent=0
    _
  %s21 = ssub.s32 1, %s19
  %s22 = scalar_select 0, %s21, %s19
  $region1: #{tpu_custom_call.1} parent=0
    #allocation2 [shape = 'u8[1024]{0}', space=vmem, size = 0x400, scoped, tag = 'input window, operand 0']
    #allocation3 [shape = 's32[2]{0}', space=sflag, size = 0x8, scoped, tag = 'scoped memory for tpu_custom_call.1']
    #allocation4 [shape = 's32[2]{0}', space=sflag, size = 0x8, scoped, tag = 'scoped memory for tpu_custom_call.1']
    #allocation5 [shape = 'u8[8192]{0}', space=vmem, size = 0x2000, scoped, tag = 'input window, operand 1']
    #allocation6 [shape = 's32[2]{0}', space=sflag, size = 0x8, scoped, tag = 'scoped memory for tpu_custom_call.1']
    #allocation7 [shape = 'u8[8192]{0}', space=vmem, size = 0x2000, scoped, tag = 'output window, operand 0']
    %23 = vsyncpa [#allocation3], 0
    %s24 = scalar_lea.sflag [#allocation3], 1
    %25 = vsyncpa %s24, 0
    %26 = vsyncpa [#allocation6], 0
    %s27 = scalar_lea.sflag [#allocation6], 1
    %28 = vsyncpa %s27, 0
    %29 = vsyncpa [#allocation4], 0
    %s30 = scalar_lea.sflag [#allocation4], 1
    %31 = vsyncpa %s30, 0
    loop: start=0, step=1, limit=6
    $region2: #{tpu_custom_call.1} parent=1 // loop_pre_header
      _
    $region3: #{tpu_custom_call.1} parent=1 // loop_header
      %s33 = sphi 0, %s37
      %p34 = scmp.ge.s32.totalorder %s33, 6
      %s40 = sphi 0, %s52
      %s41 = sphi 0, %s48
      %s42 = sphi 0, %s40
      %s43 = sphi 0, %s41
      %s44 = sphi 0, %s42
      %s45 = sphi 0, %s43
      %s55 = sphi 0, %s57
      %s58 = sphi 0, %s55
      %s59 = sphi 0, %s58
      %s75 = sphi 0, %s59
      %s81 = sphi 0, %s83
      %s84 = sphi 0, %s81
      %s85 = sphi 0, %s84
      %s101 = sphi 0, %s85
      %s107 = sphi 0, %s109
      %s110 = sphi 0, %s107
      %s111 = sphi 0, %s110
      %s127 = sphi 0, %s111
      %s133 = sphi 0, %s135
      %s136 = sphi 0, %s133
      %s137 = sphi 0, %s136
      %s153 = sphi 0, %s137
      %s159 = sphi 0, %s161
      %s162 = sphi 0, %s159
      %s163 = sphi 0, %s162
      %s179 = sphi 0, %s163
      %s185 = sphi 0, %s187
      %s188 = sphi 0, %s185
      %s189 = sphi 0, %s188
      %s205 = sphi 0, %s189
      %s211 = sphi 0, %s213
      %s214 = sphi 0, %s211
      %s215 = sphi 0, %s214
      %s231 = sphi 0, %s215
      %s237 = sphi 0, %s239
      %s240 = sphi 0, %s237
      %s241 = sphi 0, %s240
      %s257 = sphi 0, %s241
      %s263 = sphi 0, %s265
      %s266 = sphi 0, %s263
      %s267 = sphi 0, %s266
      %s283 = sphi 0, %s267
      %s289 = sphi 0, %s291
      %s292 = sphi 0, %s289
      %s293 = sphi 0, %s292
      %s309 = sphi 0, %s293
      %s315 = sphi 0, %s317
      %s318 = sphi 0, %s315
      %s319 = sphi 0, %s318
      %s335 = sphi 0, %s319
      %s341 = sphi 0, %s343
      %s344 = sphi 0, %s341
      %s345 = sphi 0, %s344
      %s361 = sphi 0, %s345
      %s367 = sphi 0, %s369
      %s370 = sphi 0, %s367
      %s371 = sphi 0, %s370
      %s387 = sphi 0, %s371
      %s393 = sphi 0, %s395
      %s396 = sphi 0, %s393
      %s397 = sphi 0, %s396
      %s413 = sphi 0, %s397
      %s419 = sphi 0, %s421
      %s422 = sphi 0, %s419
      %s423 = sphi 0, %s422
      %s439 = sphi 0, %s423
      %s445 = sphi 0, %s447
      %s448 = sphi 0, %s445
      %s449 = sphi 0, %s448
      %s465 = sphi 0, %s449
      %s471 = sphi 0, %s473
      %s474 = sphi 0, %s471
      %s475 = sphi 0, %s474
      %s491 = sphi 0, %s475
      %s497 = sphi 0, %s499
      %s500 = sphi 0, %s497
      %s501 = sphi 0, %s500
      %s517 = sphi 0, %s501
      %s523 = sphi 0, %s525
      %s526 = sphi 0, %s523
      %s527 = sphi 0, %s526
      %s543 = sphi 0, %s527
    $region4: #{tpu_custom_call.1} parent=1 // loop_header_branch
      %36 = sbr.rel (%p34) target = $region8
    $region5: #{tpu_custom_call.1} parent=1 // loop_body
      %s38 = ssub.s32 %s33, 1
      %s39 = ssub.s32 %s33, 2
      %s46 = sadd.s32 1, %s41
      %p47 = scmp.ge.s32.totalorder %s46, 2
      %s48 = scalar_select %p47, 0, %s46
      %s49 = sadd.s32 1, %s40
      %s50 = scalar_select %p47, %s49, %s40
      %p51 = scmp.ge.s32.totalorder %s50, 2
      %s52 = scalar_select %p51, 0, %s50
      %s53 = ssub.s32 %s40, %s52
      %p54 = scmp.eq.s32.totalorder %s53, 0
      %s56 = sadd.s32 %s55, 1
      %s57 = scalar_select %p54, %s55, %s56
      %p60 = pneg %p54
      %p61 = scmp.eq.s32.totalorder %s33, 3
      %p62 = por %p60, %p61
      %p63 = scmp.ne.s32.totalorder %s55, %s58
      %p64 = scmp.eq.s32.totalorder %s33, 0
      %p65 = por %p63, %p64
      %p66 = scmp.ne.s32.totalorder %s55, %s58
      %p67 = scmp.eq.s32.totalorder %s38, 3
      %p68 = por %p66, %p67
      %p69 = scmp.ne.s32.totalorder %s58, %s59
      %p70 = scmp.eq.s32.totalorder %s38, 0
      %p71 = por %p69, %p70
      %p72 = scmp.ne.s32.totalorder %s58, %s59
      %p73 = scmp.eq.s32.totalorder %s39, 3
      %p74 = por %p72, %p73
      %p76 = scmp.ne.s32.totalorder %s59, %s75
      %p77 = scmp.eq.s32.totalorder %s39, 0
      %p78 = por %p76, %p77
      %s79 = ssub.s32 %s40, %s52
      %p80 = scmp.eq.s32.totalorder %s79, 0
      %s82 = sadd.s32 %s81, 1
      %s83 = scalar_select %p80, %s81, %s82
      %p86 = pneg %p80
      %p87 = scmp.eq.s32.totalorder %s33, 3
      %p88 = por %p86, %p87
      %p89 = scmp.ne.s32.totalorder %s81, %s84
      %p90 = scmp.eq.s32.totalorder %s33, 0
      %p91 = por %p89, %p90
      %p92 = scmp.ne.s32.totalorder %s81, %s84
      %p93 = scmp.eq.s32.totalorder %s38, 3
      %p94 = por %p92, %p93
      %p95 = scmp.ne.s32.totalorder %s84, %s85
      %p96 = scmp.eq.s32.totalorder %s38, 0
      %p97 = por %p95, %p96
      %p98 = scmp.ne.s32.totalorder %s84, %s85
      %p99 = scmp.eq.s32.totalorder %s39, 3
      %p100 = por %p98, %p99
      %p102 = scmp.ne.s32.totalorder %s85, %s101
      %p103 = scmp.eq.s32.totalorder %s39, 0
      %p104 = por %p102, %p103
      %s105 = ssub.s32 %s41, %s48
      %p106 = scmp.eq.s32.totalorder %s105, 0
      %s108 = sadd.s32 %s107, 1
      %s109 = scalar_select %p106, %s107, %s108
      %p112 = pneg %p106
      %p113 = scmp.eq.s32.totalorder %s33, 3
      %p114 = por %p112, %p113
      %p115 = scmp.ne.s32.totalorder %s107, %s110
      %p116 = scmp.eq.s32.totalorder %s33, 0
      %p117 = por %p115, %p116
      %p118 = scmp.ne.s32.totalorder %s107, %s110
      %p119 = scmp.eq.s32.totalorder %s38, 3
      %p120 = por %p118, %p119
      %p121 = scmp.ne.s32.totalorder %s110, %s111
      %p122 = scmp.eq.s32.totalorder %s38, 0
      %p123 = por %p121, %p122
      %p124 = scmp.ne.s32.totalorder %s110, %s111
      %p125 = scmp.eq.s32.totalorder %s39, 3
      %p126 = por %p124, %p125
      %p128 = scmp.ne.s32.totalorder %s111, %s127
      %p129 = scmp.eq.s32.totalorder %s39, 0
      %p130 = por %p128, %p129
      %s131 = ssub.s32 %s41, %s48
      %p132 = scmp.eq.s32.totalorder %s131, 0
      %s134 = sadd.s32 %s133, 1
      %s135 = scalar_select %p132, %s133, %s134
      %p138 = pneg %p132
      %p139 = scmp.eq.s32.totalorder %s33, 3
      %p140 = por %p138, %p139
      %p141 = scmp.ne.s32.totalorder %s133, %s136
      %p142 = scmp.eq.s32.totalorder %s33, 0
      %p143 = por %p141, %p142
      %p144 = scmp.ne.s32.totalorder %s133, %s136
      %p145 = scmp.eq.s32.totalorder %s38, 3
      %p146 = por %p144, %p145
      %p147 = scmp.ne.s32.totalorder %s136, %s137
      %p148 = scmp.eq.s32.totalorder %s38, 0
      %p149 = por %p147, %p148
      %p150 = scmp.ne.s32.totalorder %s136, %s137
      %p151 = scmp.eq.s32.totalorder %s39, 3
      %p152 = por %p150, %p151
      %p154 = scmp.ne.s32.totalorder %s137, %s153
      %p155 = scmp.eq.s32.totalorder %s39, 0
      %p156 = por %p154, %p155
      %s157 = ssub.s32 %s41, %s48
      %p158 = scmp.eq.s32.totalorder %s157, 0
      %s160 = sadd.s32 %s159, 1
      %s161 = scalar_select %p158, %s159, %s160
      %p164 = pneg %p158
      %p165 = scmp.eq.s32.totalorder %s33, 3
      %p166 = por %p164, %p165
      %p167 = scmp.ne.s32.totalorder %s159, %s162
      %p168 = scmp.eq.s32.totalorder %s33, 0
      %p169 = por %p167, %p168
      %p170 = scmp.ne.s32.totalorder %s159, %s162
      %p171 = scmp.eq.s32.totalorder %s38, 3
      %p172 = por %p170, %p171
      %p173 = scmp.ne.s32.totalorder %s162, %s163
      %p174 = scmp.eq.s32.totalorder %s38, 0
      %p175 = por %p173, %p174
      %p176 = scmp.ne.s32.totalorder %s162, %s163
      %p177 = scmp.eq.s32.totalorder %s39, 3
      %p178 = por %p176, %p177
      %p180 = scmp.ne.s32.totalorder %s163, %s179
      %p181 = scmp.eq.s32.totalorder %s39, 0
      %p182 = por %p180, %p181
      %s183 = ssub.s32 %s41, %s48
      %p184 = scmp.eq.s32.totalorder %s183, 0
      %s186 = sadd.s32 %s185, 1
      %s187 = scalar_select %p184, %s185, %s186
      %p190 = pneg %p184
      %p191 = scmp.eq.s32.totalorder %s33, 3
      %p192 = por %p190, %p191
      %p193 = scmp.ne.s32.totalorder %s185, %s188
      %p194 = scmp.eq.s32.totalorder %s33, 0
      %p195 = por %p193, %p194
      %p196 = scmp.ne.s32.totalorder %s185, %s188
      %p197 = scmp.eq.s32.totalorder %s38, 3
      %p198 = por %p196, %p197
      %p199 = scmp.ne.s32.totalorder %s188, %s189
      %p200 = scmp.eq.s32.totalorder %s38, 0
      %p201 = por %p199, %p200
      %p202 = scmp.ne.s32.totalorder %s188, %s189
      %p203 = scmp.eq.s32.totalorder %s39, 3
      %p204 = por %p202, %p203
      %p206 = scmp.ne.s32.totalorder %s189, %s205
      %p207 = scmp.eq.s32.totalorder %s39, 0
      %p208 = por %p206, %p207
      %s209 = ssub.s32 %s41, %s48
      %p210 = scmp.eq.s32.totalorder %s209, 0
      %s212 = sadd.s32 %s211, 1
      %s213 = scalar_select %p210, %s211, %s212
      %p216 = pneg %p210
      %p217 = scmp.eq.s32.totalorder %s33, 3
      %p218 = por %p216, %p217
      %p219 = scmp.ne.s32.totalorder %s211, %s214
      %p220 = scmp.eq.s32.totalorder %s33, 0
      %p221 = por %p219, %p220
      %p222 = scmp.ne.s32.totalorder %s211, %s214
      %p223 = scmp.eq.s32.totalorder %s38, 3
      %p224 = por %p222, %p223
      %p225 = scmp.ne.s32.totalorder %s214, %s215
      %p226 = scmp.eq.s32.totalorder %s38, 0
      %p227 = por %p225, %p226
      %p228 = scmp.ne.s32.totalorder %s214, %s215
      %p229 = scmp.eq.s32.totalorder %s39, 3
      %p230 = por %p228, %p229
      %p232 = scmp.ne.s32.totalorder %s215, %s231
      %p233 = scmp.eq.s32.totalorder %s39, 0
      %p234 = por %p232, %p233
      %s235 = ssub.s32 %s41, %s48
      %p236 = scmp.eq.s32.totalorder %s235, 0
      %s238 = sadd.s32 %s237, 1
      %s239 = scalar_select %p236, %s237, %s238
      %p242 = pneg %p236
      %p243 = scmp.eq.s32.totalorder %s33, 3
      %p244 = por %p242, %p243
      %p245 = scmp.ne.s32.totalorder %s237, %s240
      %p246 = scmp.eq.s32.totalorder %s33, 0
      %p247 = por %p245, %p246
      %p248 = scmp.ne.s32.totalorder %s237, %s240
      %p249 = scmp.eq.s32.totalorder %s38, 3
      %p250 = por %p248, %p249
      %p251 = scmp.ne.s32.totalorder %s240, %s241
      %p252 = scmp.eq.s32.totalorder %s38, 0
      %p253 = por %p251, %p252
      %p254 = scmp.ne.s32.totalorder %s240, %s241
      %p255 = scmp.eq.s32.totalorder %s39, 3
      %p256 = por %p254, %p255
      %p258 = scmp.ne.s32.totalorder %s241, %s257
      %p259 = scmp.eq.s32.totalorder %s39, 0
      %p260 = por %p258, %p259
      %s261 = ssub.s32 %s41, %s48
      %p262 = scmp.eq.s32.totalorder %s261, 0
      %s264 = sadd.s32 %s263, 1
      %s265 = scalar_select %p262, %s263, %s264
      %p268 = pneg %p262
      %p269 = scmp.eq.s32.totalorder %s33, 3
      %p270 = por %p268, %p269
      %p271 = scmp.ne.s32.totalorder %s263, %s266
      %p272 = scmp.eq.s32.totalorder %s33, 0
      %p273 = por %p271, %p272
      %p274 = scmp.ne.s32.totalorder %s263, %s266
      %p275 = scmp.eq.s32.totalorder %s38, 3
      %p276 = por %p274, %p275
      %p277 = scmp.ne.s32.totalorder %s266, %s267
      %p278 = scmp.eq.s32.totalorder %s38, 0
      %p279 = por %p277, %p278
      %p280 = scmp.ne.s32.totalorder %s266, %s267
      %p281 = scmp.eq.s32.totalorder %s39, 3
      %p282 = por %p280, %p281
      %p284 = scmp.ne.s32.totalorder %s267, %s283
      %p285 = scmp.eq.s32.totalorder %s39, 0
      %p286 = por %p284, %p285
      %s287 = ssub.s32 %s41, %s48
      %p288 = scmp.eq.s32.totalorder %s287, 0
      %s290 = sadd.s32 %s289, 1
      %s291 = scalar_select %p288, %s289, %s290
      %p294 = pneg %p288
      %p295 = scmp.eq.s32.totalorder %s33, 3
      %p296 = por %p294, %p295
      %p297 = scmp.ne.s32.totalorder %s289, %s292
      %p298 = scmp.eq.s32.totalorder %s33, 0
      %p299 = por %p297, %p298
      %p300 = scmp.ne.s32.totalorder %s289, %s292
      %p301 = scmp.eq.s32.totalorder %s38, 3
      %p302 = por %p300, %p301
      %p303 = scmp.ne.s32.totalorder %s292, %s293
      %p304 = scmp.eq.s32.totalorder %s38, 0
      %p305 = por %p303, %p304
      %p306 = scmp.ne.s32.totalorder %s292, %s293
      %p307 = scmp.eq.s32.totalorder %s39, 3
      %p308 = por %p306, %p307
      %p310 = scmp.ne.s32.totalorder %s293, %s309
      %p311 = scmp.eq.s32.totalorder %s39, 0
      %p312 = por %p310, %p311
      %s313 = ssub.s32 %s41, %s48
      %p314 = scmp.eq.s32.totalorder %s313, 0
      %s316 = sadd.s32 %s315, 1
      %s317 = scalar_select %p314, %s315, %s316
      %p320 = pneg %p314
      %p321 = scmp.eq.s32.totalorder %s33, 3
      %p322 = por %p320, %p321
      %p323 = scmp.ne.s32.totalorder %s315, %s318
      %p324 = scmp.eq.s32.totalorder %s33, 0
      %p325 = por %p323, %p324
      %p326 = scmp.ne.s32.totalorder %s315, %s318
      %p327 = scmp.eq.s32.totalorder %s38, 3
      %p328 = por %p326, %p327
      %p329 = scmp.ne.s32.totalorder %s318, %s319
      %p330 = scmp.eq.s32.totalorder %s38, 0
      %p331 = por %p329, %p330
      %p332 = scmp.ne.s32.totalorder %s318, %s319
      %p333 = scmp.eq.s32.totalorder %s39, 3
      %p334 = por %p332, %p333
      %p336 = scmp.ne.s32.totalorder %s319, %s335
      %p337 = scmp.eq.s32.totalorder %s39, 0
      %p338 = por %p336, %p337
      %s339 = ssub.s32 %s41, %s48
      %p340 = scmp.eq.s32.totalorder %s339, 0
      %s342 = sadd.s32 %s341, 1
      %s343 = scalar_select %p340, %s341, %s342
      %p346 = pneg %p340
      %p347 = scmp.eq.s32.totalorder %s33, 3
      %p348 = por %p346, %p347
      %p349 = scmp.ne.s32.totalorder %s341, %s344
      %p350 = scmp.eq.s32.totalorder %s33, 0
      %p351 = por %p349, %p350
      %p352 = scmp.ne.s32.totalorder %s341, %s344
      %p353 = scmp.eq.s32.totalorder %s38, 3
      %p354 = por %p352, %p353
      %p355 = scmp.ne.s32.totalorder %s344, %s345
      %p356 = scmp.eq.s32.totalorder %s38, 0
      %p357 = por %p355, %p356
      %p358 = scmp.ne.s32.totalorder %s344, %s345
      %p359 = scmp.eq.s32.totalorder %s39, 3
      %p360 = por %p358, %p359
      %p362 = scmp.ne.s32.totalorder %s345, %s361
      %p363 = scmp.eq.s32.totalorder %s39, 0
      %p364 = por %p362, %p363
      %s365 = ssub.s32 %s41, %s48
      %p366 = scmp.eq.s32.totalorder %s365, 0
      %s368 = sadd.s32 %s367, 1
      %s369 = scalar_select %p366, %s367, %s368
      %p372 = pneg %p366
      %p373 = scmp.eq.s32.totalorder %s33, 3
      %p374 = por %p372, %p373
      %p375 = scmp.ne.s32.totalorder %s367, %s370
      %p376 = scmp.eq.s32.totalorder %s33, 0
      %p377 = por %p375, %p376
      %p378 = scmp.ne.s32.totalorder %s367, %s370
      %p379 = scmp.eq.s32.totalorder %s38, 3
      %p380 = por %p378, %p379
      %p381 = scmp.ne.s32.totalorder %s370, %s371
      %p382 = scmp.eq.s32.totalorder %s38, 0
      %p383 = por %p381, %p382
      %p384 = scmp.ne.s32.totalorder %s370, %s371
      %p385 = scmp.eq.s32.totalorder %s39, 3
      %p386 = por %p384, %p385
      %p388 = scmp.ne.s32.totalorder %s371, %s387
      %p389 = scmp.eq.s32.totalorder %s39, 0
      %p390 = por %p388, %p389
      %s391 = ssub.s32 %s41, %s48
      %p392 = scmp.eq.s32.totalorder %s391, 0
      %s394 = sadd.s32 %s393, 1
      %s395 = scalar_select %p392, %s393, %s394
      %p398 = pneg %p392
      %p399 = scmp.eq.s32.totalorder %s33, 3
      %p400 = por %p398, %p399
      %p401 = scmp.ne.s32.totalorder %s393, %s396
      %p402 = scmp.eq.s32.totalorder %s33, 0
      %p403 = por %p401, %p402
      %p404 = scmp.ne.s32.totalorder %s393, %s396
      %p405 = scmp.eq.s32.totalorder %s38, 3
      %p406 = por %p404, %p405
      %p407 = scmp.ne.s32.totalorder %s396, %s397
      %p408 = scmp.eq.s32.totalorder %s38, 0
      %p409 = por %p407, %p408
      %p410 = scmp.ne.s32.totalorder %s396, %s397
      %p411 = scmp.eq.s32.totalorder %s39, 3
      %p412 = por %p410, %p411
      %p414 = scmp.ne.s32.totalorder %s397, %s413
      %p415 = scmp.eq.s32.totalorder %s39, 0
      %p416 = por %p414, %p415
      %s417 = ssub.s32 %s41, %s48
      %p418 = scmp.eq.s32.totalorder %s417, 0
      %s420 = sadd.s32 %s419, 1
      %s421 = scalar_select %p418, %s419, %s420
      %p424 = pneg %p418
      %p425 = scmp.eq.s32.totalorder %s33, 3
      %p426 = por %p424, %p425
      %p427 = scmp.ne.s32.totalorder %s419, %s422
      %p428 = scmp.eq.s32.totalorder %s33, 0
      %p429 = por %p427, %p428
      %p430 = scmp.ne.s32.totalorder %s419, %s422
      %p431 = scmp.eq.s32.totalorder %s38, 3
      %p432 = por %p430, %p431
      %p433 = scmp.ne.s32.totalorder %s422, %s423
      %p434 = scmp.eq.s32.totalorder %s38, 0
      %p435 = por %p433, %p434
      %p436 = scmp.ne.s32.totalorder %s422, %s423
      %p437 = scmp.eq.s32.totalorder %s39, 3
      %p438 = por %p436, %p437
      %p440 = scmp.ne.s32.totalorder %s423, %s439
      %p441 = scmp.eq.s32.totalorder %s39, 0
      %p442 = por %p440, %p441
      %s443 = ssub.s32 %s41, %s48
      %p444 = scmp.eq.s32.totalorder %s443, 0
      %s446 = sadd.s32 %s445, 1
      %s447 = scalar_select %p444, %s445, %s446
      %p450 = pneg %p444
      %p451 = scmp.eq.s32.totalorder %s33, 3
      %p452 = por %p450, %p451
      %p453 = scmp.ne.s32.totalorder %s445, %s448
      %p454 = scmp.eq.s32.totalorder %s33, 0
      %p455 = por %p453, %p454
      %p456 = scmp.ne.s32.totalorder %s445, %s448
      %p457 = scmp.eq.s32.totalorder %s38, 3
      %p458 = por %p456, %p457
      %p459 = scmp.ne.s32.totalorder %s448, %s449
      %p460 = scmp.eq.s32.totalorder %s38, 0
      %p461 = por %p459, %p460
      %p462 = scmp.ne.s32.totalorder %s448, %s449
      %p463 = scmp.eq.s32.totalorder %s39, 3
      %p464 = por %p462, %p463
      %p466 = scmp.ne.s32.totalorder %s449, %s465
      %p467 = scmp.eq.s32.totalorder %s39, 0
      %p468 = por %p466, %p467
      %s469 = ssub.s32 %s41, %s48
      %p470 = scmp.eq.s32.totalorder %s469, 0
      %s472 = sadd.s32 %s471, 1
      %s473 = scalar_select %p470, %s471, %s472
      %p476 = pneg %p470
      %p477 = scmp.eq.s32.totalorder %s33, 3
      %p478 = por %p476, %p477
      %p479 = scmp.ne.s32.totalorder %s471, %s474
      %p480 = scmp.eq.s32.totalorder %s33, 0
      %p481 = por %p479, %p480
      %p482 = scmp.ne.s32.totalorder %s471, %s474
      %p483 = scmp.eq.s32.totalorder %s38, 3
      %p484 = por %p482, %p483
      %p485 = scmp.ne.s32.totalorder %s474, %s475
      %p486 = scmp.eq.s32.totalorder %s38, 0
      %p487 = por %p485, %p486
      %p488 = scmp.ne.s32.totalorder %s474, %s475
      %p489 = scmp.eq.s32.totalorder %s39, 3
      %p490 = por %p488, %p489
      %p492 = scmp.ne.s32.totalorder %s475, %s491
      %p493 = scmp.eq.s32.totalorder %s39, 0
      %p494 = por %p492, %p493
      %s495 = ssub.s32 %s41, %s48
      %p496 = scmp.eq.s32.totalorder %s495, 0
      %s498 = sadd.s32 %s497, 1
      %s499 = scalar_select %p496, %s497, %s498
      %p502 = pneg %p496
      %p503 = scmp.eq.s32.totalorder %s33, 3
      %p504 = por %p502, %p503
      %p505 = scmp.ne.s32.totalorder %s497, %s500
      %p506 = scmp.eq.s32.totalorder %s33, 0
      %p507 = por %p505, %p506
      %p508 = scmp.ne.s32.totalorder %s497, %s500
      %p509 = scmp.eq.s32.totalorder %s38, 3
      %p510 = por %p508, %p509
      %p511 = scmp.ne.s32.totalorder %s500, %s501
      %p512 = scmp.eq.s32.totalorder %s38, 0
      %p513 = por %p511, %p512
      %p514 = scmp.ne.s32.totalorder %s500, %s501
      %p515 = scmp.eq.s32.totalorder %s39, 3
      %p516 = por %p514, %p515
      %p518 = scmp.ne.s32.totalorder %s501, %s517
      %p519 = scmp.eq.s32.totalorder %s39, 0
      %p520 = por %p518, %p519
      %s521 = ssub.s32 %s40, %s52
      %p522 = scmp.eq.s32.totalorder %s521, 0
      %s524 = sadd.s32 %s523, 1
      %s525 = scalar_select %p522, %s523, %s524
      %p528 = pneg %p522
      %p529 = scmp.eq.s32.totalorder %s33, 3
      %p530 = por %p528, %p529
      %p531 = scmp.ne.s32.totalorder %s523, %s526
      %p532 = scmp.eq.s32.totalorder %s33, 0
      %p533 = por %p531, %p532
      %p534 = scmp.ne.s32.totalorder %s523, %s526
      %p535 = scmp.eq.s32.totalorder %s38, 3
      %p536 = por %p534, %p535
      %p537 = scmp.ne.s32.totalorder %s526, %s527
      %p538 = scmp.eq.s32.totalorder %s38, 0
      %p539 = por %p537, %p538
      %p540 = scmp.ne.s32.totalorder %s526, %s527
      %p541 = scmp.eq.s32.totalorder %s39, 3
      %p542 = por %p540, %p541
      %p544 = scmp.ne.s32.totalorder %s527, %s543
      %p545 = scmp.eq.s32.totalorder %s39, 0
      %p546 = por %p544, %p545
      %p547 = scmp.le.s32.totalorder 1, %s33
      %p548 = scmp.lt.s32.totalorder %s33, 5
      %p549 = pnand %p547, %p548
      %p550 = pneg %p549
      // Predicated region
      $region9: #{tpu_custom_call.1} parent=5 // pred_check
        _
      $region10: #{tpu_custom_call.1} parent=5 // pred_check_branch
        %552 = sbr.rel (%p549) target = $region12
      $region11: #{tpu_custom_call.1} parent=5 // pred_region
        %s553 = ssub.s32 %s33, 1
      $region12: #{tpu_custom_call.1} parent=5 // pred_fallthru
        _
      %p554 = scmp.lt.s32.totalorder %s33, 4
      // Predicated region
      $region13: #{tpu_custom_call.1} parent=5 // pred_check
        %p555 = pneg %p554
      $region14: #{tpu_custom_call.1} parent=5 // pred_check_branch
        %557 = sbr.rel (%p555) target = $region16
      $region15: #{tpu_custom_call.1} parent=5 // pred_region
        // Predicated region
        $region17: #{tpu_custom_call.1} parent=15 // pred_check
          %p558 = pneg %p65
        $region18: #{tpu_custom_call.1} parent=15 // pred_check_branch
          %560 = sbr.rel (%p558) target = $region20
        $region19: #{tpu_custom_call.1} parent=15 // pred_region
          %s561 = sand.u32 %s55, 1
          %s562 = scalar_lea.sflag [#allocation3], %s561
          %s563 = sand.u32 %s55, 1
          %s564 = scalar_lea.vmem [#allocation2], %s563
          %s566 = ssub.s32 16, 16
          %567 = vsyncadd %s562, %s566
          %s568 = smul.addr %s40, 16
          %s569 = scalar_lea.hbm %s0, %s568
          %s571 = sshll.u32 %s564, 4
          %s572 = int_to_ptr.vmem [resolvable:$true] %s571
          %574 = dma.hbm_to_vmem [thread:$0]  %s569, 16, %s572, %s562
        $region20: #{tpu_custom_call.1} parent=15 // pred_fallthru
          _
        // Predicated region
        $region21: #{tpu_custom_call.1} parent=15 // pred_check
          %p575 = pneg %p91
        $region22: #{tpu_custom_call.1} parent=15 // pred_check_branch
          %577 = sbr.rel (%p575) target = $region24
        $region23: #{tpu_custom_call.1} parent=15 // pred_region
          %s578 = sand.u32 %s81, 1
          %s579 = scalar_lea.sflag [#allocation6], %s578
          %s580 = sand.u32 %s81, 1
          %s581 = smul.addr %s580, 8
          %s582 = scalar_lea.vmem [#allocation5], %s581
          %s584 = ssub.s32 128, 128
          %585 = vsyncadd %s579, %s584
          %s586 = smul.addr %s40, 128
          %s587 = scalar_lea.hbm %s1, %s586
          %s589 = sshll.u32 %s582, 4
          %s590 = int_to_ptr.vmem [resolvable:$true] %s589
          %592 = dma.hbm_to_vmem [thread:$0]  %s587, 128, %s590, %s579
        $region24: #{tpu_custom_call.1} parent=15 // pred_fallthru
          _
        // Predicated region
        $region25: #{tpu_custom_call.1} parent=15 // pred_check
          %p593 = pneg %p117
        $region26: #{tpu_custom_call.1} parent=15 // pred_check_branch
          %595 = sbr.rel (%p593) target = $region28
        $region27: #{tpu_custom_call.1} parent=15 // pred_region
          %p596 = scmp.lt.s32.totalorder %s41, 1
          %s597 = scalar_select %p596, %s41, 1
          %s598 = smul.addr %s597, 4
          %s599 = smul.addr %s598, 4
          %s600 = scalar_lea.vmem %s2, %s599
        $region28: #{tpu_custom_call.1} parent=15 // pred_fallthru
          _
        // Predicated region
        $region29: #{tpu_custom_call.1} parent=15 // pred_check
          %p601 = pneg %p143
        $region30: #{tpu_custom_call.1} parent=15 // pred_check_branch
          %603 = sbr.rel (%p601) target = $region32
        $region31: #{tpu_custom_call.1} parent=15 // pred_region
          %p604 = scmp.lt.s32.totalorder %s41, 1
          %s605 = scalar_select %p604, %s41, 1
          %s606 = scalar_lea.vmem %s3, %s605
        $region32: #{tpu_custom_call.1} parent=15 // pred_fallthru
          _
        // Predicated region
        $region33: #{tpu_custom_call.1} parent=15 // pred_check
          %p607 = pneg %p169
        $region34: #{tpu_custom_call.1} parent=15 // pred_check_branch
          %609 = sbr.rel (%p607) target = $region36
        $region35: #{tpu_custom_call.1} parent=15 // pred_region
          %p610 = scmp.lt.s32.totalorder %s41, 1
          %s611 = scalar_select %p610, %s41, 1
          %s612 = smul.addr %s611, 4
          %s613 = smul.addr %s612, 4
          %s614 = scalar_lea.vmem %s4, %s613
        $region36: #{tpu_custom_call.1} parent=15 // pred_fallthru
          _
        // Predicated region
        $region37: #{tpu_custom_call.1} parent=15 // pred_check
          %p615 = pneg %p195
        $region38: #{tpu_custom_call.1} parent=15 // pred_check_branch
          %617 = sbr.rel (%p615) target = $region40
        $region39: #{tpu_custom_call.1} parent=15 // pred_region
          %p618 = scmp.lt.s32.totalorder %s41, 1
          %s619 = scalar_select %p618, %s41, 1
          %s620 = scalar_lea.vmem %s5, %s619
        $region40: #{tpu_custom_call.1} parent=15 // pred_fallthru
          _
        // Predicated region
        $region41: #{tpu_custom_call.1} parent=15 // pred_check
          %p621 = pneg %p221
        $region42: #{tpu_custom_call.1} parent=15 // pred_check_branch
          %623 = sbr.rel (%p621) target = $region44
        $region43: #{tpu_custom_call.1} parent=15 // pred_region
          %p624 = scmp.lt.s32.totalorder %s41, 1
          %s625 = scalar_select %p624, %s41, 1
          %s626 = smul.addr %s625, 4
          %s627 = smul.addr %s626, 4
          %s628 = scalar_lea.vmem %s6, %s627
        $region44: #{tpu_custom_call.1} parent=15 // pred_fallthru
          _
        // Predicated region
        $region45: #{tpu_custom_call.1} parent=15 // pred_check
          %p629 = pneg %p247
        $region46: #{tpu_custom_call.1} parent=15 // pred_check_branch
          %631 = sbr.rel (%p629) target = $region48
        $region47: #{tpu_custom_call.1} parent=15 // pred_region
          %p632 = scmp.lt.s32.totalorder %s41, 1
          %s633 = scalar_select %p632, %s41, 1
          %s634 = scalar_lea.vmem %s7, %s633
        $region48: #{tpu_custom_call.1} parent=15 // pred_fallthru
          _
        // Predicated region
        $region49: #{tpu_custom_call.1} parent=15 // pred_check
          %p635 = pneg %p273
        $region50: #{tpu_custom_call.1} parent=15 // pred_check_branch
          %637 = sbr.rel (%p635) target = $region52
        $region51: #{tpu_custom_call.1} parent=15 // pred_region
          %p638 = scmp.lt.s32.totalorder %s41, 1
          %s639 = scalar_select %p638, %s41, 1
          %s640 = smul.addr %s639, 4
          %s641 = smul.addr %s640, 4
          %s642 = scalar_lea.vmem %s8, %s641
        $region52: #{tpu_custom_call.1} parent=15 // pred_fallthru
          _
        // Predicated region
        $region53: #{tpu_custom_call.1} parent=15 // pred_check
          %p643 = pneg %p299
        $region54: #{tpu_custom_call.1} parent=15 // pred_check_branch
          %645 = sbr.rel (%p643) target = $region56
        $region55: #{tpu_custom_call.1} parent=15 // pred_region
          %p646 = scmp.lt.s32.totalorder %s41, 1
          %s647 = scalar_select %p646, %s41, 1
          %s648 = scalar_lea.vmem %s9, %s647
        $region56: #{tpu_custom_call.1} parent=15 // pred_fallthru
          _
        // Predicated region
        $region57: #{tpu_custom_call.1} parent=15 // pred_check
          %p649 = pneg %p325
        $region58: #{tpu_custom_call.1} parent=15 // pred_check_branch
          %651 = sbr.rel (%p649) target = $region60
        $region59: #{tpu_custom_call.1} parent=15 // pred_region
          %p652 = scmp.lt.s32.totalorder %s41, 1
          %s653 = scalar_select %p652, %s41, 1
          %s654 = scalar_lea.vmem %s10, %s653
        $region60: #{tpu_custom_call.1} parent=15 // pred_fallthru
          _
        // Predicated region
        $region61: #{tpu_custom_call.1} parent=15 // pred_check
          %p655 = pneg %p351
        $region62: #{tpu_custom_call.1} parent=15 // pred_check_branch
          %657 = sbr.rel (%p655) target = $region64
        $region63: #{tpu_custom_call.1} parent=15 // pred_region
          %p658 = scmp.lt.s32.totalorder %s41, 1
          %s659 = scalar_select %p658, %s41, 1
          %s660 = scalar_lea.vmem %s11, %s659
        $region64: #{tpu_custom_call.1} parent=15 // pred_fallthru
          _
        // Predicated region
        $region65: #{tpu_custom_call.1} parent=15 // pred_check
          %p661 = pneg %p377
        $region66: #{tpu_custom_call.1} parent=15 // pred_check_branch
          %663 = sbr.rel (%p661) target = $region68
        $region67: #{tpu_custom_call.1} parent=15 // pred_region
          %p664 = scmp.lt.s32.totalorder %s41, 1
          %s665 = scalar_select %p664, %s41, 1
          %s666 = smul.addr %s665, 4
          %s667 = smul.addr %s666, 4
          %s668 = scalar_lea.vmem %s12, %s667
        $region68: #{tpu_custom_call.1} parent=15 // pred_fallthru
          _
        // Predicated region
        $region69: #{tpu_custom_call.1} parent=15 // pred_check
          %p669 = pneg %p403
        $region70: #{tpu_custom_call.1} parent=15 // pred_check_branch
          %671 = sbr.rel (%p669) target = $region72
        $region71: #{tpu_custom_call.1} parent=15 // pred_region
          %p672 = scmp.lt.s32.totalorder %s41, 1
          %s673 = scalar_select %p672, %s41, 1
          %s674 = scalar_lea.vmem %s13, %s673
        $region72: #{tpu_custom_call.1} parent=15 // pred_fallthru
          _
        // Predicated region
        $region73: #{tpu_custom_call.1} parent=15 // pred_check
          %p675 = pneg %p429
        $region74: #{tpu_custom_call.1} parent=15 // pred_check_branch
          %677 = sbr.rel (%p675) target = $region76
        $region75: #{tpu_custom_call.1} parent=15 // pred_region
          %p678 = scmp.lt.s32.totalorder %s41, 1
          %s679 = scalar_select %p678, %s41, 1
          %s680 = smul.addr %s679, 16
          %s681 = smul.addr %s680, 4
          %s682 = scalar_lea.vmem %s14, %s681
        $region76: #{tpu_custom_call.1} parent=15 // pred_fallthru
          _
        // Predicated region
        $region77: #{tpu_custom_call.1} parent=15 // pred_check
          %p683 = pneg %p455
        $region78: #{tpu_custom_call.1} parent=15 // pred_check_branch
          %685 = sbr.rel (%p683) target = $region80
        $region79: #{tpu_custom_call.1} parent=15 // pred_region
          %p686 = scmp.lt.s32.totalorder %s41, 1
          %s687 = scalar_select %p686, %s41, 1
          %s688 = scalar_lea.vmem %s15, %s687
        $region80: #{tpu_custom_call.1} parent=15 // pred_fallthru
          _
        // Predicated region
        $region81: #{tpu_custom_call.1} parent=15 // pred_check
          %p689 = pneg %p481
        $region82: #{tpu_custom_call.1} parent=15 // pred_check_branch
          %691 = sbr.rel (%p689) target = $region84
        $region83: #{tpu_custom_call.1} parent=15 // pred_region
          %p692 = scmp.lt.s32.totalorder %s41, 1
          %s693 = scalar_select %p692, %s41, 1
          %s694 = scalar_lea.vmem %s16, %s693
        $region84: #{tpu_custom_call.1} parent=15 // pred_fallthru
          _
        // Predicated region
        $region85: #{tpu_custom_call.1} parent=15 // pred_check
          %p695 = pneg %p507
        $region86: #{tpu_custom_call.1} parent=15 // pred_check_branch
          %697 = sbr.rel (%p695) target = $region88
        $region87: #{tpu_custom_call.1} parent=15 // pred_region
          %p698 = scmp.lt.s32.totalorder %s41, 1
          %s699 = scalar_select %p698, %s41, 1
          %s700 = scalar_lea.vmem %s17, %s699
        $region88: #{tpu_custom_call.1} parent=15 // pred_fallthru
          _
      $region16: #{tpu_custom_call.1} parent=5 // pred_fallthru
        _
      %p701 = scmp.le.s32.totalorder 1, %s33
      %p702 = scmp.lt.s32.totalorder %s33, 5
      %p703 = pnand %p701, %p702
      %p704 = pneg %p703
      // Predicated region
      $region89: #{tpu_custom_call.1} parent=5 // pred_check
        _
      $region90: #{tpu_custom_call.1} parent=5 // pred_check_branch
        %706 = sbr.rel (%p703) target = $region92
      $region91: #{tpu_custom_call.1} parent=5 // pred_region
        %s707 = ssub.s32 %s33, 1
        %s708 = sand.u32 %s58, 1
        %s709 = scalar_lea.sflag [#allocation3], %s708
        %s710 = sand.u32 %s58, 1
        %s711 = scalar_lea.vmem [#allocation2], %s710
        // Predicated region
        $region93: #{tpu_custom_call.1} parent=91 // pred_check
          %p712 = pneg %p71
        $region94: #{tpu_custom_call.1} parent=91 // pred_check_branch
          %714 = sbr.rel (%p712) target = $region96
        $region95: #{tpu_custom_call.1} parent=91 // pred_region
          %715 = dma.done %s709, 16
        $region96: #{tpu_custom_call.1} parent=91 // pred_fallthru
          _
        %s716 = sand.u32 %s84, 1
        %s717 = scalar_lea.sflag [#allocation6], %s716
        %s718 = sand.u32 %s84, 1
        %s719 = smul.addr %s718, 8
        %s720 = scalar_lea.vmem [#allocation5], %s719
        // Predicated region
        $region97: #{tpu_custom_call.1} parent=91 // pred_check
          %p721 = pneg %p97
        $region98: #{tpu_custom_call.1} parent=91 // pred_check_branch
          %723 = sbr.rel (%p721) target = $region100
        $region99: #{tpu_custom_call.1} parent=91 // pred_region
          %724 = dma.done %s717, 128
        $region100: #{tpu_custom_call.1} parent=91 // pred_fallthru
          _
        %s725 = sand.u32 %s58, 1
        %s726 = scalar_lea.sflag [#allocation3], %s725
        %s727 = sand.u32 %s58, 1
        %s728 = scalar_lea.vmem [#allocation2], %s727
        %p729 = pneg %p71
        %p730 = pneg %p68
        %s731 = sand.u32 %s84, 1
        %s732 = scalar_lea.sflag [#allocation6], %s731
        %s733 = sand.u32 %s84, 1
        %s734 = smul.addr %s733, 8
        %s735 = scalar_lea.vmem [#allocation5], %s734
        %p736 = pneg %p97
        %p737 = pneg %p94
        %p738 = scmp.lt.s32.totalorder %s43, 1
        %s739 = scalar_select %p738, %s43, 1
        %s740 = smul.addr %s739, 4
        %s741 = smul.addr %s740, 4
        %s742 = scalar_lea.vmem %s2, %s741
        %p743 = pneg %p123
        %p744 = pneg %p120
        %p745 = scmp.lt.s32.totalorder %s43, 1
        %s746 = scalar_select %p745, %s43, 1
        %s747 = scalar_lea.vmem %s3, %s746
        %p748 = pneg %p149
        %p749 = pneg %p146
        %p750 = scmp.lt.s32.totalorder %s43, 1
        %s751 = scalar_select %p750, %s43, 1
        %s752 = smul.addr %s751, 4
        %s753 = smul.addr %s752, 4
        %s754 = scalar_lea.vmem %s4, %s753
        %p755 = pneg %p175
        %p756 = pneg %p172
        %p757 = scmp.lt.s32.totalorder %s43, 1
        %s758 = scalar_select %p757, %s43, 1
        %s759 = scalar_lea.vmem %s5, %s758
        %p760 = pneg %p201
        %p761 = pneg %p198
        %p762 = scmp.lt.s32.totalorder %s43, 1
        %s763 = scalar_select %p762, %s43, 1
        %s764 = smul.addr %s763, 4
        %s765 = smul.addr %s764, 4
        %s766 = scalar_lea.vmem %s6, %s765
        %p767 = pneg %p227
        %p768 = pneg %p224
        %p769 = scmp.lt.s32.totalorder %s43, 1
        %s770 = scalar_select %p769, %s43, 1
        %s771 = scalar_lea.vmem %s7, %s770
        %p772 = pneg %p253
        %p773 = pneg %p250
        %p774 = scmp.lt.s32.totalorder %s43, 1
        %s775 = scalar_select %p774, %s43, 1
        %s776 = smul.addr %s775, 4
        %s777 = smul.addr %s776, 4
        %s778 = scalar_lea.vmem %s8, %s777
        %p779 = pneg %p279
        %p780 = pneg %p276
        %p781 = scmp.lt.s32.totalorder %s43, 1
        %s782 = scalar_select %p781, %s43, 1
        %s783 = scalar_lea.vmem %s9, %s782
        %p784 = pneg %p305
        %p785 = pneg %p302
        %p786 = scmp.lt.s32.totalorder %s43, 1
        %s787 = scalar_select %p786, %s43, 1
        %s788 = scalar_lea.vmem %s10, %s787
        %p789 = pneg %p331
        %p790 = pneg %p328
        %p791 = scmp.lt.s32.totalorder %s43, 1
        %s792 = scalar_select %p791, %s43, 1
        %s793 = scalar_lea.vmem %s11, %s792
        %p794 = pneg %p357
        %p795 = pneg %p354
        %p796 = scmp.lt.s32.totalorder %s43, 1
        %s797 = scalar_select %p796, %s43, 1
        %s798 = smul.addr %s797, 4
        %s799 = smul.addr %s798, 4
        %s800 = scalar_lea.vmem %s12, %s799
        %p801 = pneg %p383
        %p802 = pneg %p380
        %p803 = scmp.lt.s32.totalorder %s43, 1
        %s804 = scalar_select %p803, %s43, 1
        %s805 = scalar_lea.vmem %s13, %s804
        %p806 = pneg %p409
        %p807 = pneg %p406
        %p808 = scmp.lt.s32.totalorder %s43, 1
        %s809 = scalar_select %p808, %s43, 1
        %s810 = smul.addr %s809, 16
        %s811 = smul.addr %s810, 4
        %s812 = scalar_lea.vmem %s14, %s811
        %p813 = pneg %p435
        %p814 = pneg %p432
        %p815 = scmp.lt.s32.totalorder %s43, 1
        %s816 = scalar_select %p815, %s43, 1
        %s817 = scalar_lea.vmem %s15, %s816
        %p818 = pneg %p461
        %p819 = pneg %p458
        %p820 = scmp.lt.s32.totalorder %s43, 1
        %s821 = scalar_select %p820, %s43, 1
        %s822 = scalar_lea.vmem %s16, %s821
        %p823 = pneg %p487
        %p824 = pneg %p484
        %p825 = scmp.lt.s32.totalorder %s43, 1
        %s826 = scalar_select %p825, %s43, 1
        %s827 = scalar_lea.vmem %s17, %s826
        %p828 = pneg %p513
        %p829 = pneg %p510
        %p830 = pneg %p539
        %p831 = pneg %p536
        %s832 = sand.u32 %s526, 1
        %s833 = scalar_lea.sflag [#allocation4], %s832
        %s834 = sand.u32 %s526, 1
        %s835 = smul.addr %s834, 8
        %s836 = scalar_lea.vmem [#allocation7], %s835
        %p837 = scmp.lt.s32.totalorder %s43, 1
        %s838 = scalar_select %p837, %s43, 1
        %s839 = smul.addr %s838, 4
        %s840 = smul.addr %s839, 4
        %s841 = scalar_lea.vmem %s2, %s840
        %p842 = scmp.lt.s32.totalorder %s43, 1
        %s843 = scalar_select %p842, %s43, 1
        %s844 = scalar_lea.vmem %s3, %s843
        %p845 = scmp.lt.s32.totalorder %s43, 1
        %s846 = scalar_select %p845, %s43, 1
        %s847 = smul.addr %s846, 4
        %s848 = smul.addr %s847, 4
        %s849 = scalar_lea.vmem %s4, %s848
        %p850 = scmp.lt.s32.totalorder %s43, 1
        %s851 = scalar_select %p850, %s43, 1
        %s852 = scalar_lea.vmem %s5, %s851
        %p853 = scmp.lt.s32.totalorder %s43, 1
        %s854 = scalar_select %p853, %s43, 1
        %s855 = smul.addr %s854, 4
        %s856 = smul.addr %s855, 4
        %s857 = scalar_lea.vmem %s6, %s856
        %p858 = scmp.lt.s32.totalorder %s43, 1
        %s859 = scalar_select %p858, %s43, 1
        %s860 = scalar_lea.vmem %s7, %s859
        %p861 = scmp.lt.s32.totalorder %s43, 1
        %s862 = scalar_select %p861, %s43, 1
        %s863 = smul.addr %s862, 4
        %s864 = smul.addr %s863, 4
        %s865 = scalar_lea.vmem %s8, %s864
        %p866 = scmp.lt.s32.totalorder %s43, 1
        %s867 = scalar_select %p866, %s43, 1
        %s868 = scalar_lea.vmem %s9, %s867
        %p869 = scmp.lt.s32.totalorder %s43, 1
        %s870 = scalar_select %p869, %s43, 1
        %s871 = scalar_lea.vmem %s10, %s870
        %p872 = scmp.lt.s32.totalorder %s43, 1
        %s873 = scalar_select %p872, %s43, 1
        %s874 = scalar_lea.vmem %s11, %s873
        %p875 = scmp.lt.s32.totalorder %s43, 1
        %s876 = scalar_select %p875, %s43, 1
        %s877 = smul.addr %s876, 4
        %s878 = smul.addr %s877, 4
        %s879 = scalar_lea.vmem %s12, %s878
        %p880 = scmp.lt.s32.totalorder %s43, 1
        %s881 = scalar_select %p880, %s43, 1
        %s882 = scalar_lea.vmem %s13, %s881
        %p883 = scmp.lt.s32.totalorder %s43, 1
        %s884 = scalar_select %p883, %s43, 1
        %s885 = smul.addr %s884, 16
        %s886 = smul.addr %s885, 4
        %s887 = scalar_lea.vmem %s14, %s886
        %p888 = scmp.lt.s32.totalorder %s43, 1
        %s889 = scalar_select %p888, %s43, 1
        %s890 = scalar_lea.vmem %s15, %s889
        %p891 = scmp.lt.s32.totalorder %s43, 1
        %s892 = scalar_select %p891, %s43, 1
        %s893 = scalar_lea.vmem %s16, %s892
        %p894 = scmp.lt.s32.totalorder %s43, 1
        %s895 = scalar_select %p894, %s43, 1
        %s896 = scalar_lea.vmem %s17, %s895
        %p898 = scmp.eq.s32.totalorder %s43, 0
        // Predicated region
        $region101: #{tpu_custom_call.1} parent=91 // pred_check
          %p899 = pneg %p898
        $region102: #{tpu_custom_call.1} parent=91 // pred_check_branch
          %901 = sbr.rel (%p899) target = $region104
        $region103: #{tpu_custom_call.1} parent=91 // pred_region
          %v902 = vld [vmem:[%s720] sm:$0xff]
          %vm903 = vcmask 261120
          %904 = vst.msk [vmem:[%s836] sm:$0xff] %vm903, %v902
        $region104: #{tpu_custom_call.1} parent=91 // pred_fallthru
          _
        %v905 = vld [vmem:[%s836] sm:$0xff]
        %v906 = vpack.c.bf16 %v905, %v905
        %v907 = vld [vmem:[%s841] sm:$0xf]
        %v908 = vld [vmem:[%s841 + $0x4] sm:$0xf]
        %v909 = vld [vmem:[%s841 + $0x8] sm:$0xf]
        %v910 = vld [vmem:[%s841 + $0xc] sm:$0xf]
        %v911 = vld [vmem:[%s844] sm:$0x1]
        %v913 = vlaneseq
        %v914 = vshrl.u32 %v913, 7
        %v915 = vsub.s32 0, %v914
        %v916 = vrot.slane %v911, %v915
        %v922 = vunpack.c.l.b16 %v907
        %v923 = vunpack.c.l.b16 %v908
        %v924 = vunpack.c.l.b16 %v909
        %v925 = vunpack.c.l.b16 %v910
        %v926 = vpack.c.b16 %v923, %v922
        %v927 = vpack.c.b16 %v925, %v924
        %vm930 = vcmask 261120
        %v932 = vsel %vm930, %v906, 0
        %934 = vmatprep.subr.bf16.mxu0 0
        %935 = vmatpush1.bf16.msra.mxu0 0
        %936 = vmatprep.subr.bf16.mxu0 0
        %937 = vmatpush1.bf16.msra.mxu0 0
        %938 = vmatprep.subr.bf16.mxu0 0
        %939 = vmatpush1.bf16.msra.mxu0 0
        %940 = vmatprep.subr.bf16.mxu0 0
        %941 = vmatpush1.bf16.msra.mxu0 0
        %942 = vmatprep.subr.bf16.mxu0 0
        %943 = vmatpush1.bf16.msra.mxu0 0
        %944 = vmatprep.subr.bf16.mxu0 0
        %945 = vmatpush1.bf16.msra.mxu0 0
        %946 = vmatprep.subr.bf16.mxu0 0
        %947 = vmatpush1.bf16.msra.mxu0 %v927
        %948 = vmatprep.subr.bf16.mxu0 0
        %949 = vmatpush1.bf16.msra.mxu0 %v926
        %950 = vmatprep.subr.bf16.mxu0 0
        %951 = vmatpush2.bf16.msra.mxu0 0
        %952 = vmatprep.subr.bf16.mxu0 0
        %953 = vmatpush2.bf16.msra.mxu0 0
        %954 = vmatprep.subr.bf16.mxu0 0
        %955 = vmatpush2.bf16.msra.mxu0 0
        %956 = vmatprep.subr.bf16.mxu0 0
        %957 = vmatpush2.bf16.msra.mxu0 0
        %958 = vmatprep.subr.bf16.mxu0 0
        %959 = vmatpush2.bf16.msra.mxu0 0
        %960 = vmatprep.subr.bf16.mxu0 0
        %961 = vmatpush2.bf16.msra.mxu0 0
        %962 = vmatprep.subr.bf16.mxu0 0
        %963 = vmatpush2.bf16.msra.mxu0 0
        %964 = vmatprep.subr.bf16.mxu0 0
        %965 = vmatpush2.bf16.msra.mxu0 0
        %966 = vmatprep.mubr.bf16.mxu0 0
        %967 = vmatmul.mubr.bf16.gmra.mxu0 %v932
        %v968 = vpop.f32.mrf.mxu0
        %v969 = vadd.f32 %v916, %v968
        %v970 = vpop.f32.mrf.mxu0
        %v971 = vpop.f32.mrf.mxu0
        %v972 = vpop.f32.mrf.mxu0
        %973 = vdwg.mxu0
        %v974 = vld [vmem:[%s849] sm:$0xf]
        %v975 = vld [vmem:[%s849 + $0x4] sm:$0xf]
        %v976 = vld [vmem:[%s849 + $0x8] sm:$0xf]
        %v977 = vld [vmem:[%s849 + $0xc] sm:$0xf]
        %v978 = vld [vmem:[%s852] sm:$0x1]
        %v980 = vlaneseq
        %v981 = vshrl.u32 %v980, 7
        %v982 = vsub.s32 0, %v981
        %v983 = vrot.slane %v978, %v982
        %v989 = vunpack.c.l.b16 %v974
        %v990 = vunpack.c.l.b16 %v975
        %v991 = vunpack.c.l.b16 %v976
        %v992 = vunpack.c.l.b16 %v977
        %v993 = vpack.c.b16 %v990, %v989
        %v994 = vpack.c.b16 %v992, %v991
        %997 = vmatprep.subr.bf16.mxu0 0
        %998 = vmatpush1.bf16.msra.mxu0 0
        %999 = vmatprep.subr.bf16.mxu0 0
        %1000 = vmatpush1.bf16.msra.mxu0 0
        %1001 = vmatprep.subr.bf16.mxu0 0
        %1002 = vmatpush1.bf16.msra.mxu0 0
        %1003 = vmatprep.subr.bf16.mxu0 0
        %1004 = vmatpush1.bf16.msra.mxu0 0
        %1005 = vmatprep.subr.bf16.mxu0 0
        %1006 = vmatpush1.bf16.msra.mxu0 0
        %1007 = vmatprep.subr.bf16.mxu0 0
        %1008 = vmatpush1.bf16.msra.mxu0 0
        %1009 = vmatprep.subr.bf16.mxu0 0
        %1010 = vmatpush1.bf16.msra.mxu0 %v994
        %1011 = vmatprep.subr.bf16.mxu0 0
        %1012 = vmatpush1.bf16.msra.mxu0 %v993
        %1013 = vmatprep.subr.bf16.mxu0 0
        %1014 = vmatpush2.bf16.msra.mxu0 0
        %1015 = vmatprep.subr.bf16.mxu0 0
        %1016 = vmatpush2.bf16.msra.mxu0 0
        %1017 = vmatprep.subr.bf16.mxu0 0
        %1018 = vmatpush2.bf16.msra.mxu0 0
        %1019 = vmatprep.subr.bf16.mxu0 0
        %1020 = vmatpush2.bf16.msra.mxu0 0
        %1021 = vmatprep.subr.bf16.mxu0 0
        %1022 = vmatpush2.bf16.msra.mxu0 0
        %1023 = vmatprep.subr.bf16.mxu0 0
        %1024 = vmatpush2.bf16.msra.mxu0 0
        %1025 = vmatprep.subr.bf16.mxu0 0
        %1026 = vmatpush2.bf16.msra.mxu0 0
        %1027 = vmatprep.subr.bf16.mxu0 0
        %1028 = vmatpush2.bf16.msra.mxu0 0
        %1029 = vmatprep.mubr.bf16.mxu0 0
        %1030 = vmatmul.mubr.bf16.gmra.mxu0 %v932
        %v1031 = vpop.f32.mrf.mxu0
        %v1032 = vadd.f32 %v983, %v1031
        %v1033 = vpop.f32.mrf.mxu0
        %v1034 = vpop.f32.mrf.mxu0
        %v1035 = vpop.f32.mrf.mxu0
        %1036 = vdwg.mxu0
        %v1037 = vld [vmem:[%s857] sm:$0xf]
        %v1038 = vld [vmem:[%s857 + $0x4] sm:$0xf]
        %v1039 = vld [vmem:[%s857 + $0x8] sm:$0xf]
        %v1040 = vld [vmem:[%s857 + $0xc] sm:$0xf]
        %v1041 = vld [vmem:[%s860] sm:$0x1]
        %v1043 = vlaneseq
        %v1044 = vshrl.u32 %v1043, 7
        %v1045 = vsub.s32 0, %v1044
        %v1046 = vrot.slane %v1041, %v1045
        %v1052 = vunpack.c.l.b16 %v1037
        %v1053 = vunpack.c.l.b16 %v1038
        %v1054 = vunpack.c.l.b16 %v1039
        %v1055 = vunpack.c.l.b16 %v1040
        %v1056 = vpack.c.b16 %v1053, %v1052
        %v1057 = vpack.c.b16 %v1055, %v1054
        %1060 = vmatprep.subr.bf16.mxu0 0
        %1061 = vmatpush1.bf16.msra.mxu0 0
        %1062 = vmatprep.subr.bf16.mxu0 0
        %1063 = vmatpush1.bf16.msra.mxu0 0
        %1064 = vmatprep.subr.bf16.mxu0 0
        %1065 = vmatpush1.bf16.msra.mxu0 0
        %1066 = vmatprep.subr.bf16.mxu0 0
        %1067 = vmatpush1.bf16.msra.mxu0 0
        %1068 = vmatprep.subr.bf16.mxu0 0
        %1069 = vmatpush1.bf16.msra.mxu0 0
        %1070 = vmatprep.subr.bf16.mxu0 0
        %1071 = vmatpush1.bf16.msra.mxu0 0
        %1072 = vmatprep.subr.bf16.mxu0 0
        %1073 = vmatpush1.bf16.msra.mxu0 %v1057
        %1074 = vmatprep.subr.bf16.mxu0 0
        %1075 = vmatpush1.bf16.msra.mxu0 %v1056
        %1076 = vmatprep.subr.bf16.mxu0 0
        %1077 = vmatpush2.bf16.msra.mxu0 0
        %1078 = vmatprep.subr.bf16.mxu0 0
        %1079 = vmatpush2.bf16.msra.mxu0 0
        %1080 = vmatprep.subr.bf16.mxu0 0
        %1081 = vmatpush2.bf16.msra.mxu0 0
        %1082 = vmatprep.subr.bf16.mxu0 0
        %1083 = vmatpush2.bf16.msra.mxu0 0
        %1084 = vmatprep.subr.bf16.mxu0 0
        %1085 = vmatpush2.bf16.msra.mxu0 0
        %1086 = vmatprep.subr.bf16.mxu0 0
        %1087 = vmatpush2.bf16.msra.mxu0 0
        %1088 = vmatprep.subr.bf16.mxu0 0
        %1089 = vmatpush2.bf16.msra.mxu0 0
        %1090 = vmatprep.subr.bf16.mxu0 0
        %1091 = vmatpush2.bf16.msra.mxu0 0
        %1092 = vmatprep.mubr.bf16.mxu0 0
        %1093 = vmatmul.mubr.bf16.gmra.mxu0 %v932
        %v1094 = vpop.f32.mrf.mxu0
        %v1095 = vadd.f32 %v1046, %v1094
        %v1096 = vpop.f32.mrf.mxu0
        %v1097 = vpop.f32.mrf.mxu0
        %v1098 = vpop.f32.mrf.mxu0
        %1099 = vdwg.mxu0
        %v1100 = vpack.c.bf16 %v969, %v969
        %1102 = vrot.lane.b32.xlu0 %v1100, 120
        %v1103 = vpop.permute.xlu0 %1102
        %1104 = vrot.lane.b32.xlu0 %v1100, 112
        %v1105 = vpop.permute.xlu0 %1104
        %1106 = vrot.lane.b32.xlu0 %v1100, 104
        %v1107 = vpop.permute.xlu0 %1106
        %v1109 = vunpack.c.l.s4 1983009808
        %v1110 = vunpack.c.0.s8 %v1109
        %v1111 = vlaneseq
        %v1112 = vshrl.u32 %v1111, 7
        %v1113 = vsub.s32 %v1110, %v1112
        %v1114 = vrot.slane %v1100, %v1113
        %v1117 = vunpack.c.l.s4 1983009808
        %v1118 = vunpack.c.0.s8 %v1117
        %v1119 = vlaneseq
        %v1120 = vshrl.u32 %v1119, 7
        %v1121 = vsub.s32 %v1118, %v1120
        %v1122 = vrot.slane %v1105, %v1121
        %v1123 = vcombine.low %v1114, %v1122
        %v1124 = vcombine.high %v1114, %v1122
        %v1126 = vunpack.c.l.s4 1934713408
        %v1127 = vunpack.c.0.s8 %v1126
        %v1128 = vlaneseq
        %v1129 = vshrl.u32 %v1128, 7
        %v1130 = vsub.s32 %v1127, %v1129
        %v1131 = vrot.slane %v1123, %v1130
        %v1133 = vunpack.c.l.s4 1934713408
        %v1134 = vunpack.c.0.s8 %v1133
        %v1135 = vlaneseq
        %v1136 = vshrl.u32 %v1135, 7
        %v1137 = vsub.s32 %v1134, %v1136
        %v1138 = vrot.slane %v1124, %v1137
        %v1139 = vcombine.high %v1131, 0
        %v1140 = vcombine.high %v1138, 0
        %v1143 = vunpack.c.l.s4 1983009808
        %v1144 = vunpack.c.0.s8 %v1143
        %v1145 = vlaneseq
        %v1146 = vshrl.u32 %v1145, 7
        %v1147 = vsub.s32 %v1144, %v1146
        %v1148 = vrot.slane %v1103, %v1147
        %v1151 = vunpack.c.l.s4 1983009808
        %v1152 = vunpack.c.0.s8 %v1151
        %v1153 = vlaneseq
        %v1154 = vshrl.u32 %v1153, 7
        %v1155 = vsub.s32 %v1152, %v1154
        %v1156 = vrot.slane %v1107, %v1155
        %v1157 = vcombine.low %v1148, %v1156
        %v1158 = vcombine.high %v1148, %v1156
        %v1160 = vunpack.c.l.s4 1934713408
        %v1161 = vunpack.c.0.s8 %v1160
        %v1162 = vlaneseq
        %v1163 = vshrl.u32 %v1162, 7
        %v1164 = vsub.s32 %v1161, %v1163
        %v1165 = vrot.slane %v1157, %v1164
        %v1167 = vunpack.c.l.s4 1934713408
        %v1168 = vunpack.c.0.s8 %v1167
        %v1169 = vlaneseq
        %v1170 = vshrl.u32 %v1169, 7
        %v1171 = vsub.s32 %v1168, %v1170
        %v1172 = vrot.slane %v1158, %v1171
        %v1173 = vcombine.high %v1165, 0
        %v1174 = vcombine.high %v1172, 0
        %v1177 = vpack.i.b16 %v1165, %v1131
        %v1179 = vshrl.u32 %v1131, 16
        %v1180 = vshrl.u32 %v1165, 16
        %v1181 = vpack.i.b16 %v1180, %v1179
        %v1185 = vpack.i.b16 %v1173, %v1139
        %v1187 = vshrl.u32 %v1139, 16
        %v1188 = vshrl.u32 %v1173, 16
        %v1189 = vpack.i.b16 %v1188, %v1187
        %v1193 = vpack.i.b16 %v1172, %v1138
        %v1195 = vshrl.u32 %v1138, 16
        %v1196 = vshrl.u32 %v1172, 16
        %v1197 = vpack.i.b16 %v1196, %v1195
        %v1201 = vpack.i.b16 %v1174, %v1140
        %v1203 = vshrl.u32 %v1140, 16
        %v1204 = vshrl.u32 %v1174, 16
        %v1205 = vpack.i.b16 %v1204, %v1203
        %v1207 = vcombine.low %v1177, %v1193
        %v1209 = vunpack.c.l.s4 1983009808
        %v1210 = vunpack.c.0.s8 %v1209
        %v1211 = vlaneseq
        %v1212 = vshrl.u32 %v1211, 7
        %v1213 = vsub.s32 %v1210, %v1212
        %v1214 = vrot.slane %v1207, %v1213
        %v1215 = vcombine.low %v1185, %v1201
        %v1217 = vunpack.c.l.s4 1983009808
        %v1218 = vunpack.c.0.s8 %v1217
        %v1219 = vlaneseq
        %v1220 = vshrl.u32 %v1219, 7
        %v1221 = vsub.s32 %v1218, %v1220
        %v1222 = vrot.slane %v1215, %v1221
        %v1223 = vcombine.low %v1214, %v1222
        %v1225 = vunpack.c.l.s4 1934713408
        %v1226 = vunpack.c.0.s8 %v1225
        %v1227 = vlaneseq
        %v1228 = vshrl.u32 %v1227, 7
        %v1229 = vsub.s32 %v1226, %v1228
        %v1230 = vrot.slane %v1223, %v1229
        %v1231 = vcombine.high %v1230, 0
        %v1232 = vcombine.low %v1181, %v1197
        %v1234 = vunpack.c.l.s4 1983009808
        %v1235 = vunpack.c.0.s8 %v1234
        %v1236 = vlaneseq
        %v1237 = vshrl.u32 %v1236, 7
        %v1238 = vsub.s32 %v1235, %v1237
        %v1239 = vrot.slane %v1232, %v1238
        %v1240 = vcombine.low %v1189, %v1205
        %v1242 = vunpack.c.l.s4 1983009808
        %v1243 = vunpack.c.0.s8 %v1242
        %v1244 = vlaneseq
        %v1245 = vshrl.u32 %v1244, 7
        %v1246 = vsub.s32 %v1243, %v1245
        %v1247 = vrot.slane %v1240, %v1246
        %v1248 = vcombine.low %v1239, %v1247
        %v1250 = vunpack.c.l.s4 1934713408
        %v1251 = vunpack.c.0.s8 %v1250
        %v1252 = vlaneseq
        %v1253 = vshrl.u32 %v1252, 7
        %v1254 = vsub.s32 %v1251, %v1253
        %v1255 = vrot.slane %v1248, %v1254
        %v1256 = vcombine.high %v1255, 0
        %v1259 = vpack.i.b16 %v1255, %v1230
        %v1260 = vshrl.u32 %v1230, 16
        %v1261 = vshrl.u32 %v1255, 16
        %v1262 = vpack.i.b16 %v1261, %v1260
        %v1265 = vpack.i.b16 %v1256, %v1231
        %v1266 = vshrl.u32 %v1231, 16
        %v1267 = vshrl.u32 %v1256, 16
        %v1268 = vpack.i.b16 %v1267, %v1266
        %v1269 = vpack.c.bf16 %v1032, %v1032
        %1271 = vrot.lane.b32.xlu0 %v1269, 120
        %v1272 = vpop.permute.xlu0 %1271
        %1273 = vrot.lane.b32.xlu0 %v1269, 112
        %v1274 = vpop.permute.xlu0 %1273
        %1275 = vrot.lane.b32.xlu0 %v1269, 104
        %v1276 = vpop.permute.xlu0 %1275
        %v1278 = vunpack.c.l.s4 1983009808
        %v1279 = vunpack.c.0.s8 %v1278
        %v1280 = vlaneseq
        %v1281 = vshrl.u32 %v1280, 7
        %v1282 = vsub.s32 %v1279, %v1281
        %v1283 = vrot.slane %v1269, %v1282
        %v1286 = vunpack.c.l.s4 1983009808
        %v1287 = vunpack.c.0.s8 %v1286
        %v1288 = vlaneseq
        %v1289 = vshrl.u32 %v1288, 7
        %v1290 = vsub.s32 %v1287, %v1289
        %v1291 = vrot.slane %v1274, %v1290
        %v1292 = vcombine.low %v1283, %v1291
        %v1293 = vcombine.high %v1283, %v1291
        %v1295 = vunpack.c.l.s4 1934713408
        %v1296 = vunpack.c.0.s8 %v1295
        %v1297 = vlaneseq
        %v1298 = vshrl.u32 %v1297, 7
        %v1299 = vsub.s32 %v1296, %v1298
        %v1300 = vrot.slane %v1292, %v1299
        %v1302 = vunpack.c.l.s4 1934713408
        %v1303 = vunpack.c.0.s8 %v1302
        %v1304 = vlaneseq
        %v1305 = vshrl.u32 %v1304, 7
        %v1306 = vsub.s32 %v1303, %v1305
        %v1307 = vrot.slane %v1293, %v1306
        %v1308 = vcombine.high %v1300, 0
        %v1309 = vcombine.high %v1307, 0
        %v1312 = vunpack.c.l.s4 1983009808
        %v1313 = vunpack.c.0.s8 %v1312
        %v1314 = vlaneseq
        %v1315 = vshrl.u32 %v1314, 7
        %v1316 = vsub.s32 %v1313, %v1315
        %v1317 = vrot.slane %v1272, %v1316
        %v1320 = vunpack.c.l.s4 1983009808
        %v1321 = vunpack.c.0.s8 %v1320
        %v1322 = vlaneseq
        %v1323 = vshrl.u32 %v1322, 7
        %v1324 = vsub.s32 %v1321, %v1323
        %v1325 = vrot.slane %v1276, %v1324
        %v1326 = vcombine.low %v1317, %v1325
        %v1327 = vcombine.high %v1317, %v1325
        %v1329 = vunpack.c.l.s4 1934713408
        %v1330 = vunpack.c.0.s8 %v1329
        %v1331 = vlaneseq
        %v1332 = vshrl.u32 %v1331, 7
        %v1333 = vsub.s32 %v1330, %v1332
        %v1334 = vrot.slane %v1326, %v1333
        %v1336 = vunpack.c.l.s4 1934713408
        %v1337 = vunpack.c.0.s8 %v1336
        %v1338 = vlaneseq
        %v1339 = vshrl.u32 %v1338, 7
        %v1340 = vsub.s32 %v1337, %v1339
        %v1341 = vrot.slane %v1327, %v1340
        %v1342 = vcombine.high %v1334, 0
        %v1343 = vcombine.high %v1341, 0
        %v1346 = vpack.i.b16 %v1334, %v1300
        %v1348 = vshrl.u32 %v1300, 16
        %v1349 = vshrl.u32 %v1334, 16
        %v1350 = vpack.i.b16 %v1349, %v1348
        %v1354 = vpack.i.b16 %v1342, %v1308
        %v1356 = vshrl.u32 %v1308, 16
        %v1357 = vshrl.u32 %v1342, 16
        %v1358 = vpack.i.b16 %v1357, %v1356
        %v1362 = vpack.i.b16 %v1341, %v1307
        %v1364 = vshrl.u32 %v1307, 16
        %v1365 = vshrl.u32 %v1341, 16
        %v1366 = vpack.i.b16 %v1365, %v1364
        %v1370 = vpack.i.b16 %v1343, %v1309
        %v1372 = vshrl.u32 %v1309, 16
        %v1373 = vshrl.u32 %v1343, 16
        %v1374 = vpack.i.b16 %v1373, %v1372
        %v1376 = vcombine.low %v1346, %v1362
        %v1378 = vunpack.c.l.s4 1983009808
        %v1379 = vunpack.c.0.s8 %v1378
        %v1380 = vlaneseq
        %v1381 = vshrl.u32 %v1380, 7
        %v1382 = vsub.s32 %v1379, %v1381
        %v1383 = vrot.slane %v1376, %v1382
        %v1384 = vcombine.low %v1354, %v1370
        %v1386 = vunpack.c.l.s4 1983009808
        %v1387 = vunpack.c.0.s8 %v1386
        %v1388 = vlaneseq
        %v1389 = vshrl.u32 %v1388, 7
        %v1390 = vsub.s32 %v1387, %v1389
        %v1391 = vrot.slane %v1384, %v1390
        %v1392 = vcombine.low %v1383, %v1391
        %v1394 = vunpack.c.l.s4 1934713408
        %v1395 = vunpack.c.0.s8 %v1394
        %v1396 = vlaneseq
        %v1397 = vshrl.u32 %v1396, 7
        %v1398 = vsub.s32 %v1395, %v1397
        %v1399 = vrot.slane %v1392, %v1398
        %v1400 = vcombine.high %v1399, 0
        %v1401 = vcombine.low %v1350, %v1366
        %v1403 = vunpack.c.l.s4 1983009808
        %v1404 = vunpack.c.0.s8 %v1403
        %v1405 = vlaneseq
        %v1406 = vshrl.u32 %v1405, 7
        %v1407 = vsub.s32 %v1404, %v1406
        %v1408 = vrot.slane %v1401, %v1407
        %v1409 = vcombine.low %v1358, %v1374
        %v1411 = vunpack.c.l.s4 1983009808
        %v1412 = vunpack.c.0.s8 %v1411
        %v1413 = vlaneseq
        %v1414 = vshrl.u32 %v1413, 7
        %v1415 = vsub.s32 %v1412, %v1414
        %v1416 = vrot.slane %v1409, %v1415
        %v1417 = vcombine.low %v1408, %v1416
        %v1419 = vunpack.c.l.s4 1934713408
        %v1420 = vunpack.c.0.s8 %v1419
        %v1421 = vlaneseq
        %v1422 = vshrl.u32 %v1421, 7
        %v1423 = vsub.s32 %v1420, %v1422
        %v1424 = vrot.slane %v1417, %v1423
        %v1425 = vcombine.high %v1424, 0
        %v1428 = vpack.i.b16 %v1424, %v1399
        %v1429 = vshrl.u32 %v1399, 16
        %v1430 = vshrl.u32 %v1424, 16
        %v1431 = vpack.i.b16 %v1430, %v1429
        %v1434 = vpack.i.b16 %v1425, %v1400
        %v1435 = vshrl.u32 %v1400, 16
        %v1436 = vshrl.u32 %v1425, 16
        %v1437 = vpack.i.b16 %v1436, %v1435
        %v1438 = vpack.c.bf16 %v1095, %v1095
        %1440 = vrot.lane.b32.xlu0 %v1438, 120
        %v1441 = vpop.permute.xlu0 %1440
        %1442 = vrot.lane.b32.xlu0 %v1438, 112
        %v1443 = vpop.permute.xlu0 %1442
        %1444 = vrot.lane.b32.xlu0 %v1438, 104
        %v1445 = vpop.permute.xlu0 %1444
        %v1447 = vunpack.c.l.s4 1983009808
        %v1448 = vunpack.c.0.s8 %v1447
        %v1449 = vlaneseq
        %v1450 = vshrl.u32 %v1449, 7
        %v1451 = vsub.s32 %v1448, %v1450
        %v1452 = vrot.slane %v1438, %v1451
        %v1455 = vunpack.c.l.s4 1983009808
        %v1456 = vunpack.c.0.s8 %v1455
        %v1457 = vlaneseq
        %v1458 = vshrl.u32 %v1457, 7
        %v1459 = vsub.s32 %v1456, %v1458
        %v1460 = vrot.slane %v1443, %v1459
        %v1461 = vcombine.low %v1452, %v1460
        %v1462 = vcombine.high %v1452, %v1460
        %v1464 = vunpack.c.l.s4 1934713408
        %v1465 = vunpack.c.0.s8 %v1464
        %v1466 = vlaneseq
        %v1467 = vshrl.u32 %v1466, 7
        %v1468 = vsub.s32 %v1465, %v1467
        %v1469 = vrot.slane %v1461, %v1468
        %v1471 = vunpack.c.l.s4 1934713408
        %v1472 = vunpack.c.0.s8 %v1471
        %v1473 = vlaneseq
        %v1474 = vshrl.u32 %v1473, 7
        %v1475 = vsub.s32 %v1472, %v1474
        %v1476 = vrot.slane %v1462, %v1475
        %v1477 = vcombine.high %v1469, 0
        %v1478 = vcombine.high %v1476, 0
        %v1481 = vunpack.c.l.s4 1983009808
        %v1482 = vunpack.c.0.s8 %v1481
        %v1483 = vlaneseq
        %v1484 = vshrl.u32 %v1483, 7
        %v1485 = vsub.s32 %v1482, %v1484
        %v1486 = vrot.slane %v1441, %v1485
        %v1489 = vunpack.c.l.s4 1983009808
        %v1490 = vunpack.c.0.s8 %v1489
        %v1491 = vlaneseq
        %v1492 = vshrl.u32 %v1491, 7
        %v1493 = vsub.s32 %v1490, %v1492
        %v1494 = vrot.slane %v1445, %v1493
        %v1495 = vcombine.low %v1486, %v1494
        %v1496 = vcombine.high %v1486, %v1494
        %v1498 = vunpack.c.l.s4 1934713408
        %v1499 = vunpack.c.0.s8 %v1498
        %v1500 = vlaneseq
        %v1501 = vshrl.u32 %v1500, 7
        %v1502 = vsub.s32 %v1499, %v1501
        %v1503 = vrot.slane %v1495, %v1502
        %v1505 = vunpack.c.l.s4 1934713408
        %v1506 = vunpack.c.0.s8 %v1505
        %v1507 = vlaneseq
        %v1508 = vshrl.u32 %v1507, 7
        %v1509 = vsub.s32 %v1506, %v1508
        %v1510 = vrot.slane %v1496, %v1509
        %v1511 = vcombine.high %v1503, 0
        %v1512 = vcombine.high %v1510, 0
        %v1515 = vpack.i.b16 %v1503, %v1469
        %v1517 = vshrl.u32 %v1469, 16
        %v1518 = vshrl.u32 %v1503, 16
        %v1519 = vpack.i.b16 %v1518, %v1517
        %v1523 = vpack.i.b16 %v1511, %v1477
        %v1525 = vshrl.u32 %v1477, 16
        %v1526 = vshrl.u32 %v1511, 16
        %v1527 = vpack.i.b16 %v1526, %v1525
        %v1531 = vpack.i.b16 %v1510, %v1476
        %v1533 = vshrl.u32 %v1476, 16
        %v1534 = vshrl.u32 %v1510, 16
        %v1535 = vpack.i.b16 %v1534, %v1533
        %v1539 = vpack.i.b16 %v1512, %v1478
        %v1541 = vshrl.u32 %v1478, 16
        %v1542 = vshrl.u32 %v1512, 16
        %v1543 = vpack.i.b16 %v1542, %v1541
        %v1545 = vcombine.low %v1515, %v1531
        %v1547 = vunpack.c.l.s4 1983009808
        %v1548 = vunpack.c.0.s8 %v1547
        %v1549 = vlaneseq
        %v1550 = vshrl.u32 %v1549, 7
        %v1551 = vsub.s32 %v1548, %v1550
        %v1552 = vrot.slane %v1545, %v1551
        %v1553 = vcombine.low %v1523, %v1539
        %v1555 = vunpack.c.l.s4 1983009808
        %v1556 = vunpack.c.0.s8 %v1555
        %v1557 = vlaneseq
        %v1558 = vshrl.u32 %v1557, 7
        %v1559 = vsub.s32 %v1556, %v1558
        %v1560 = vrot.slane %v1553, %v1559
        %v1561 = vcombine.low %v1552, %v1560
        %v1563 = vunpack.c.l.s4 1934713408
        %v1564 = vunpack.c.0.s8 %v1563
        %v1565 = vlaneseq
        %v1566 = vshrl.u32 %v1565, 7
        %v1567 = vsub.s32 %v1564, %v1566
        %v1568 = vrot.slane %v1561, %v1567
        %v1569 = vcombine.high %v1568, 0
        %v1570 = vcombine.low %v1519, %v1535
        %v1572 = vunpack.c.l.s4 1983009808
        %v1573 = vunpack.c.0.s8 %v1572
        %v1574 = vlaneseq
        %v1575 = vshrl.u32 %v1574, 7
        %v1576 = vsub.s32 %v1573, %v1575
        %v1577 = vrot.slane %v1570, %v1576
        %v1578 = vcombine.low %v1527, %v1543
        %v1580 = vunpack.c.l.s4 1983009808
        %v1581 = vunpack.c.0.s8 %v1580
        %v1582 = vlaneseq
        %v1583 = vshrl.u32 %v1582, 7
        %v1584 = vsub.s32 %v1581, %v1583
        %v1585 = vrot.slane %v1578, %v1584
        %v1586 = vcombine.low %v1577, %v1585
        %v1588 = vunpack.c.l.s4 1934713408
        %v1589 = vunpack.c.0.s8 %v1588
        %v1590 = vlaneseq
        %v1591 = vshrl.u32 %v1590, 7
        %v1592 = vsub.s32 %v1589, %v1591
        %v1593 = vrot.slane %v1586, %v1592
        %v1594 = vcombine.high %v1593, 0
        %v1597 = vpack.i.b16 %v1593, %v1568
        %v1598 = vshrl.u32 %v1568, 16
        %v1599 = vshrl.u32 %v1593, 16
        %v1600 = vpack.i.b16 %v1599, %v1598
        %v1603 = vpack.i.b16 %v1594, %v1569
        %v1604 = vshrl.u32 %v1569, 16
        %v1605 = vshrl.u32 %v1594, 16
        %v1606 = vpack.i.b16 %v1605, %v1604
        %vm1607 = vcmask 64512
        %v1609 = vsel %vm1607, %v1259, 0
        %v1612 = vsel %vm1607, %v1428, 0
        %1614 = vmatprep.subr.bf16.mxu0 0
        %1615 = vmatpush1.bf16.xpose.msra.mxu0 0
        %1616 = vmatprep.subr.bf16.mxu0 0
        %1617 = vmatpush1.bf16.xpose.msra.mxu0 0
        %1618 = vmatprep.subr.bf16.mxu0 0
        %1619 = vmatpush1.bf16.xpose.msra.mxu0 0
        %1620 = vmatprep.subr.bf16.mxu0 0
        %1621 = vmatpush1.bf16.xpose.msra.mxu0 0
        %1622 = vmatprep.subr.bf16.mxu0 0
        %1623 = vmatpush1.bf16.xpose.msra.mxu0 0
        %1624 = vmatprep.subr.bf16.mxu0 0
        %1625 = vmatpush1.bf16.xpose.msra.mxu0 0
        %1626 = vmatprep.subr.bf16.mxu0 0
        %1627 = vmatpush1.bf16.xpose.msra.mxu0 0
        %1628 = vmatprep.subr.bf16.mxu0 0
        %1629 = vmatpush1.bf16.xpose.msra.mxu0 %v1612
        %1630 = vmatprep.subr.bf16.mxu0 0
        %1631 = vmatpush2.bf16.xpose.msra.mxu0 0
        %1632 = vmatprep.subr.bf16.mxu0 0
        %1633 = vmatpush2.bf16.xpose.msra.mxu0 0
        %1634 = vmatprep.subr.bf16.mxu0 0
        %1635 = vmatpush2.bf16.xpose.msra.mxu0 0
        %1636 = vmatprep.subr.bf16.mxu0 0
        %1637 = vmatpush2.bf16.xpose.msra.mxu0 0
        %1638 = vmatprep.subr.bf16.mxu0 0
        %1639 = vmatpush2.bf16.xpose.msra.mxu0 0
        %1640 = vmatprep.subr.bf16.mxu0 0
        %1641 = vmatpush2.bf16.xpose.msra.mxu0 0
        %1642 = vmatprep.subr.bf16.mxu0 0
        %1643 = vmatpush2.bf16.xpose.msra.mxu0 0
        %1644 = vmatprep.subr.bf16.mxu0 0
        %1645 = vmatpush2.bf16.xpose.msra.mxu0 0
        %1646 = vmatprep.mubr.bf16.mxu0 0
        %1647 = vmatmul.mubr.bf16.gmra.mxu0 %v1609
        %v1648 = vpop.f32.mrf.mxu0
        %v1649 = vadd.f32 0.0, %v1648
        %v1650 = vpop.f32.mrf.mxu0
        %v1651 = vpop.f32.mrf.mxu0
        %v1652 = vpop.f32.mrf.mxu0
        %1653 = vdwg.mxu0
        %v1655 = vsel %vm1607, %v1262, 0
        %v1658 = vsel %vm1607, %v1431, 0
        %1660 = vmatprep.subr.bf16.mxu0 0
        %1661 = vmatpush1.bf16.xpose.msra.mxu0 0
        %1662 = vmatprep.subr.bf16.mxu0 0
        %1663 = vmatpush1.bf16.xpose.msra.mxu0 0
        %1664 = vmatprep.subr.bf16.mxu0 0
        %1665 = vmatpush1.bf16.xpose.msra.mxu0 0
        %1666 = vmatprep.subr.bf16.mxu0 0
        %1667 = vmatpush1.bf16.xpose.msra.mxu0 0
        %1668 = vmatprep.subr.bf16.mxu0 0
        %1669 = vmatpush1.bf16.xpose.msra.mxu0 0
        %1670 = vmatprep.subr.bf16.mxu0 0
        %1671 = vmatpush1.bf16.xpose.msra.mxu0 0
        %1672 = vmatprep.subr.bf16.mxu0 0
        %1673 = vmatpush1.bf16.xpose.msra.mxu0 0
        %1674 = vmatprep.subr.bf16.mxu0 0
        %1675 = vmatpush1.bf16.xpose.msra.mxu0 %v1658
        %1676 = vmatprep.subr.bf16.mxu0 0
        %1677 = vmatpush2.bf16.xpose.msra.mxu0 0
        %1678 = vmatprep.subr.bf16.mxu0 0
        %1679 = vmatpush2.bf16.xpose.msra.mxu0 0
        %1680 = vmatprep.subr.bf16.mxu0 0
        %1681 = vmatpush2.bf16.xpose.msra.mxu0 0
        %1682 = vmatprep.subr.bf16.mxu0 0
        %1683 = vmatpush2.bf16.xpose.msra.mxu0 0
        %1684 = vmatprep.subr.bf16.mxu0 0
        %1685 = vmatpush2.bf16.xpose.msra.mxu0 0
        %1686 = vmatprep.subr.bf16.mxu0 0
        %1687 = vmatpush2.bf16.xpose.msra.mxu0 0
        %1688 = vmatprep.subr.bf16.mxu0 0
        %1689 = vmatpush2.bf16.xpose.msra.mxu0 0
        %1690 = vmatprep.subr.bf16.mxu0 0
        %1691 = vmatpush2.bf16.xpose.msra.mxu0 0
        %1692 = vmatprep.mubr.bf16.mxu0 0
        %1693 = vmatmul.mubr.bf16.gmra.mxu0 %v1655
        %v1694 = vpop.f32.mrf.mxu0
        %v1695 = vadd.f32 0.0, %v1694
        %v1696 = vpop.f32.mrf.mxu0
        %v1697 = vpop.f32.mrf.mxu0
        %v1698 = vpop.f32.mrf.mxu0
        %1699 = vdwg.mxu0
        %v1701 = vsel %vm1607, %v1265, 0
        %v1704 = vsel %vm1607, %v1434, 0
        %1706 = vmatprep.subr.bf16.mxu0 0
        %1707 = vmatpush1.bf16.xpose.msra.mxu0 0
        %1708 = vmatprep.subr.bf16.mxu0 0
        %1709 = vmatpush1.bf16.xpose.msra.mxu0 0
        %1710 = vmatprep.subr.bf16.mxu0 0
        %1711 = vmatpush1.bf16.xpose.msra.mxu0 0
        %1712 = vmatprep.subr.bf16.mxu0 0
        %1713 = vmatpush1.bf16.xpose.msra.mxu0 0
        %1714 = vmatprep.subr.bf16.mxu0 0
        %1715 = vmatpush1.bf16.xpose.msra.mxu0 0
        %1716 = vmatprep.subr.bf16.mxu0 0
        %1717 = vmatpush1.bf16.xpose.msra.mxu0 0
        %1718 = vmatprep.subr.bf16.mxu0 0
        %1719 = vmatpush1.bf16.xpose.msra.mxu0 0
        %1720 = vmatprep.subr.bf16.mxu0 0
        %1721 = vmatpush1.bf16.xpose.msra.mxu0 %v1704
        %1722 = vmatprep.subr.bf16.mxu0 0
        %1723 = vmatpush2.bf16.xpose.msra.mxu0 0
        %1724 = vmatprep.subr.bf16.mxu0 0
        %1725 = vmatpush2.bf16.xpose.msra.mxu0 0
        %1726 = vmatprep.subr.bf16.mxu0 0
        %1727 = vmatpush2.bf16.xpose.msra.mxu0 0
        %1728 = vmatprep.subr.bf16.mxu0 0
        %1729 = vmatpush2.bf16.xpose.msra.mxu0 0
        %1730 = vmatprep.subr.bf16.mxu0 0
        %1731 = vmatpush2.bf16.xpose.msra.mxu0 0
        %1732 = vmatprep.subr.bf16.mxu0 0
        %1733 = vmatpush2.bf16.xpose.msra.mxu0 0
        %1734 = vmatprep.subr.bf16.mxu0 0
        %1735 = vmatpush2.bf16.xpose.msra.mxu0 0
        %1736 = vmatprep.subr.bf16.mxu0 0
        %1737 = vmatpush2.bf16.xpose.msra.mxu0 0
        %1738 = vmatprep.mubr.bf16.mxu0 0
        %1739 = vmatmul.mubr.bf16.gmra.mxu0 %v1701
        %v1740 = vpop.f32.mrf.mxu0
        %v1741 = vadd.f32 0.0, %v1740
        %v1742 = vpop.f32.mrf.mxu0
        %v1743 = vpop.f32.mrf.mxu0
        %v1744 = vpop.f32.mrf.mxu0
        %1745 = vdwg.mxu0
        %v1747 = vsel %vm1607, %v1268, 0
        %v1750 = vsel %vm1607, %v1437, 0
        %1752 = vmatprep.subr.bf16.mxu0 0
        %1753 = vmatpush1.bf16.xpose.msra.mxu0 0
        %1754 = vmatprep.subr.bf16.mxu0 0
        %1755 = vmatpush1.bf16.xpose.msra.mxu0 0
        %1756 = vmatprep.subr.bf16.mxu0 0
        %1757 = vmatpush1.bf16.xpose.msra.mxu0 0
        %1758 = vmatprep.subr.bf16.mxu0 0
        %1759 = vmatpush1.bf16.xpose.msra.mxu0 0
        %1760 = vmatprep.subr.bf16.mxu0 0
        %1761 = vmatpush1.bf16.xpose.msra.mxu0 0
        %1762 = vmatprep.subr.bf16.mxu0 0
        %1763 = vmatpush1.bf16.xpose.msra.mxu0 0
        %1764 = vmatprep.subr.bf16.mxu0 0
        %1765 = vmatpush1.bf16.xpose.msra.mxu0 0
        %1766 = vmatprep.subr.bf16.mxu0 0
        %1767 = vmatpush1.bf16.xpose.msra.mxu0 %v1750
        %1768 = vmatprep.subr.bf16.mxu0 0
        %1769 = vmatpush2.bf16.xpose.msra.mxu0 0
        %1770 = vmatprep.subr.bf16.mxu0 0
        %1771 = vmatpush2.bf16.xpose.msra.mxu0 0
        %1772 = vmatprep.subr.bf16.mxu0 0
        %1773 = vmatpush2.bf16.xpose.msra.mxu0 0
        %1774 = vmatprep.subr.bf16.mxu0 0
        %1775 = vmatpush2.bf16.xpose.msra.mxu0 0
        %1776 = vmatprep.subr.bf16.mxu0 0
        %1777 = vmatpush2.bf16.xpose.msra.mxu0 0
        %1778 = vmatprep.subr.bf16.mxu0 0
        %1779 = vmatpush2.bf16.xpose.msra.mxu0 0
        %1780 = vmatprep.subr.bf16.mxu0 0
        %1781 = vmatpush2.bf16.xpose.msra.mxu0 0
        %1782 = vmatprep.subr.bf16.mxu0 0
        %1783 = vmatpush2.bf16.xpose.msra.mxu0 0
        %1784 = vmatprep.mubr.bf16.mxu0 0
        %1785 = vmatmul.mubr.bf16.gmra.mxu0 %v1747
        %v1786 = vpop.f32.mrf.mxu0
        %v1787 = vadd.f32 0.0, %v1786
        %v1788 = vpop.f32.mrf.mxu0
        %v1789 = vpop.f32.mrf.mxu0
        %v1790 = vpop.f32.mrf.mxu0
        %1791 = vdwg.mxu0
        %v1792 = vmul.f32 %v1649, 0.35355338
        %v1793 = vmul.f32 %v1695, 0.35355338
        %v1794 = vmul.f32 %v1741, 0.35355338
        %v1795 = vmul.f32 %v1787, 0.35355338
        %v1796 = vld [vmem:[%s711] sm:$0x1]
        %v1798 = vlaneseq
        %v1799 = vshrl.u32 %v1798, 7
        %v1800 = vsub.s32 0, %v1799
        %v1801 = vrot.slane %v1796, %v1800
        %v1803 = vadd.f32 %v1792, %v1801
        %v1804 = vadd.f32 %v1793, %v1801
        %v1805 = vadd.f32 %v1794, %v1801
        %v1806 = vadd.f32 %v1795, %v1801
        %v1807 = vsel %vm1607, %v1803, -inf
        %1808 = vmax.xlane.f32.xlu0 %v1807
        %v1809 = vpop.xlane.xlu0 %1808
        %v1810 = vsel %vm1607, %v1804, -inf
        %1811 = vmax.xlane.f32.xlu0 %v1810
        %v1812 = vpop.xlane.xlu0 %1811
        %v1813 = vsel %vm1607, %v1805, -inf
        %1814 = vmax.xlane.f32.xlu0 %v1813
        %v1815 = vpop.xlane.xlu0 %1814
        %v1816 = vsel %vm1607, %v1806, -inf
        %1817 = vmax.xlane.f32.xlu0 %v1816
        %v1818 = vpop.xlane.xlu0 %1817
        %v1819 = vsub.f32 %v1803, %v1809
        %v1820 = vsub.f32 %v1804, %v1812
        %v1821 = vsub.f32 %v1805, %v1815
        %v1822 = vsub.f32 %v1806, %v1818
        %v1823 = vmul.f32 %v1819, 1.442695
        %v1824 = vpow.pop %v1823
        %v1825 = vmul.f32 %v1820, 1.442695
        %v1826 = vpow.pop %v1825
        %v1827 = vmul.f32 %v1821, 1.442695
        %v1828 = vpow.pop %v1827
        %v1829 = vmul.f32 %v1822, 1.442695
        %v1830 = vpow.pop %v1829
        %v1831 = vsel %vm1607, %v1824, 0.0
        %1832 = vadd.xlane.f32.xlu0 %v1831
        %v1833 = vpop.xlane.xlu0 %1832
        %v1834 = vsel %vm1607, %v1826, 0.0
        %1835 = vadd.xlane.f32.xlu0 %v1834
        %v1836 = vpop.xlane.xlu0 %1835
        %v1837 = vsel %vm1607, %v1828, 0.0
        %1838 = vadd.xlane.f32.xlu0 %v1837
        %v1839 = vpop.xlane.xlu0 %1838
        %v1840 = vsel %vm1607, %v1830, 0.0
        %1841 = vadd.xlane.f32.xlu0 %v1840
        %v1842 = vpop.xlane.xlu0 %1841
        %v1843 = vrcp.pop %v1833
        %v1844 = vrcp.pop %v1836
        %v1845 = vrcp.pop %v1839
        %v1846 = vrcp.pop %v1842
        %v1847 = vmul.f32 %v1824, %v1843
        %v1848 = vmul.f32 %v1826, %v1844
        %v1849 = vmul.f32 %v1828, %v1845
        %v1850 = vmul.f32 %v1830, %v1846
        %v1851 = vpack.c.bf16 %v1847, %v1847
        %v1852 = vpack.c.bf16 %v1848, %v1848
        %v1853 = vpack.c.bf16 %v1849, %v1849
        %v1854 = vpack.c.bf16 %v1850, %v1850
        %v1856 = vsel %vm1607, %v1851, 0
        %vm1858 = vcmask 1043456
        %v1860 = vsel %vm1858, %v1597, 0
        %1862 = vmatprep.subr.bf16.mxu0 0
        %1863 = vmatpush1.bf16.msra.mxu0 0
        %1864 = vmatprep.subr.bf16.mxu0 0
        %1865 = vmatpush1.bf16.msra.mxu0 0
        %1866 = vmatprep.subr.bf16.mxu0 0
        %1867 = vmatpush1.bf16.msra.mxu0 0
        %1868 = vmatprep.subr.bf16.mxu0 0
        %1869 = vmatpush1.bf16.msra.mxu0 0
        %1870 = vmatprep.subr.bf16.mxu0 0
        %1871 = vmatpush1.bf16.msra.mxu0 0
        %1872 = vmatprep.subr.bf16.mxu0 0
        %1873 = vmatpush1.bf16.msra.mxu0 0
        %1874 = vmatprep.subr.bf16.mxu0 0
        %1875 = vmatpush1.bf16.msra.mxu0 0
        %1876 = vmatprep.subr.bf16.mxu0 0
        %1877 = vmatpush1.bf16.msra.mxu0 %v1860
        %1878 = vmatprep.subr.bf16.mxu0 0
        %1879 = vmatpush2.bf16.msra.mxu0 0
        %1880 = vmatprep.subr.bf16.mxu0 0
        %1881 = vmatpush2.bf16.msra.mxu0 0
        %1882 = vmatprep.subr.bf16.mxu0 0
        %1883 = vmatpush2.bf16.msra.mxu0 0
        %1884 = vmatprep.subr.bf16.mxu0 0
        %1885 = vmatpush2.bf16.msra.mxu0 0
        %1886 = vmatprep.subr.bf16.mxu0 0
        %1887 = vmatpush2.bf16.msra.mxu0 0
        %1888 = vmatprep.subr.bf16.mxu0 0
        %1889 = vmatpush2.bf16.msra.mxu0 0
        %1890 = vmatprep.subr.bf16.mxu0 0
        %1891 = vmatpush2.bf16.msra.mxu0 0
        %1892 = vmatprep.subr.bf16.mxu0 0
        %1893 = vmatpush2.bf16.msra.mxu0 0
        %1894 = vmatprep.mubr.bf16.mxu0 0
        %1895 = vmatmul.mubr.bf16.gmra.mxu0 %v1856
        %v1896 = vpop.f32.mrf.mxu0
        %v1897 = vadd.f32 0.0, %v1896
        %v1898 = vpop.f32.mrf.mxu0
        %v1899 = vpop.f32.mrf.mxu0
        %v1900 = vpop.f32.mrf.mxu0
        %1901 = vdwg.mxu0
        %v1903 = vsel %vm1607, %v1852, 0
        %v1906 = vsel %vm1858, %v1600, 0
        %1908 = vmatprep.subr.bf16.mxu0 0
        %1909 = vmatpush1.bf16.msra.mxu0 0
        %1910 = vmatprep.subr.bf16.mxu0 0
        %1911 = vmatpush1.bf16.msra.mxu0 0
        %1912 = vmatprep.subr.bf16.mxu0 0
        %1913 = vmatpush1.bf16.msra.mxu0 0
        %1914 = vmatprep.subr.bf16.mxu0 0
        %1915 = vmatpush1.bf16.msra.mxu0 0
        %1916 = vmatprep.subr.bf16.mxu0 0
        %1917 = vmatpush1.bf16.msra.mxu0 0
        %1918 = vmatprep.subr.bf16.mxu0 0
        %1919 = vmatpush1.bf16.msra.mxu0 0
        %1920 = vmatprep.subr.bf16.mxu0 0
        %1921 = vmatpush1.bf16.msra.mxu0 0
        %1922 = vmatprep.subr.bf16.mxu0 0
        %1923 = vmatpush1.bf16.msra.mxu0 %v1906
        %1924 = vmatprep.subr.bf16.mxu0 0
        %1925 = vmatpush2.bf16.msra.mxu0 0
        %1926 = vmatprep.subr.bf16.mxu0 0
        %1927 = vmatpush2.bf16.msra.mxu0 0
        %1928 = vmatprep.subr.bf16.mxu0 0
        %1929 = vmatpush2.bf16.msra.mxu0 0
        %1930 = vmatprep.subr.bf16.mxu0 0
        %1931 = vmatpush2.bf16.msra.mxu0 0
        %1932 = vmatprep.subr.bf16.mxu0 0
        %1933 = vmatpush2.bf16.msra.mxu0 0
        %1934 = vmatprep.subr.bf16.mxu0 0
        %1935 = vmatpush2.bf16.msra.mxu0 0
        %1936 = vmatprep.subr.bf16.mxu0 0
        %1937 = vmatpush2.bf16.msra.mxu0 0
        %1938 = vmatprep.subr.bf16.mxu0 0
        %1939 = vmatpush2.bf16.msra.mxu0 0
        %1940 = vmatprep.mubr.bf16.mxu0 0
        %1941 = vmatmul.mubr.bf16.gmra.mxu0 %v1903
        %v1942 = vpop.f32.mrf.mxu0
        %v1943 = vadd.f32 0.0, %v1942
        %v1944 = vpop.f32.mrf.mxu0
        %v1945 = vpop.f32.mrf.mxu0
        %v1946 = vpop.f32.mrf.mxu0
        %1947 = vdwg.mxu0
        %v1949 = vsel %vm1607, %v1853, 0
        %v1952 = vsel %vm1858, %v1603, 0
        %1954 = vmatprep.subr.bf16.mxu0 0
        %1955 = vmatpush1.bf16.msra.mxu0 0
        %1956 = vmatprep.subr.bf16.mxu0 0
        %1957 = vmatpush1.bf16.msra.mxu0 0
        %1958 = vmatprep.subr.bf16.mxu0 0
        %1959 = vmatpush1.bf16.msra.mxu0 0
        %1960 = vmatprep.subr.bf16.mxu0 0
        %1961 = vmatpush1.bf16.msra.mxu0 0
        %1962 = vmatprep.subr.bf16.mxu0 0
        %1963 = vmatpush1.bf16.msra.mxu0 0
        %1964 = vmatprep.subr.bf16.mxu0 0
        %1965 = vmatpush1.bf16.msra.mxu0 0
        %1966 = vmatprep.subr.bf16.mxu0 0
        %1967 = vmatpush1.bf16.msra.mxu0 0
        %1968 = vmatprep.subr.bf16.mxu0 0
        %1969 = vmatpush1.bf16.msra.mxu0 %v1952
        %1970 = vmatprep.subr.bf16.mxu0 0
        %1971 = vmatpush2.bf16.msra.mxu0 0
        %1972 = vmatprep.subr.bf16.mxu0 0
        %1973 = vmatpush2.bf16.msra.mxu0 0
        %1974 = vmatprep.subr.bf16.mxu0 0
        %1975 = vmatpush2.bf16.msra.mxu0 0
        %1976 = vmatprep.subr.bf16.mxu0 0
        %1977 = vmatpush2.bf16.msra.mxu0 0
        %1978 = vmatprep.subr.bf16.mxu0 0
        %1979 = vmatpush2.bf16.msra.mxu0 0
        %1980 = vmatprep.subr.bf16.mxu0 0
        %1981 = vmatpush2.bf16.msra.mxu0 0
        %1982 = vmatprep.subr.bf16.mxu0 0
        %1983 = vmatpush2.bf16.msra.mxu0 0
        %1984 = vmatprep.subr.bf16.mxu0 0
        %1985 = vmatpush2.bf16.msra.mxu0 0
        %1986 = vmatprep.mubr.bf16.mxu0 0
        %1987 = vmatmul.mubr.bf16.gmra.mxu0 %v1949
        %v1988 = vpop.f32.mrf.mxu0
        %v1989 = vadd.f32 0.0, %v1988
        %v1990 = vpop.f32.mrf.mxu0
        %v1991 = vpop.f32.mrf.mxu0
        %v1992 = vpop.f32.mrf.mxu0
        %1993 = vdwg.mxu0
        %v1995 = vsel %vm1607, %v1854, 0
        %v1998 = vsel %vm1858, %v1606, 0
        %2000 = vmatprep.subr.bf16.mxu0 0
        %2001 = vmatpush1.bf16.msra.mxu0 0
        %2002 = vmatprep.subr.bf16.mxu0 0
        %2003 = vmatpush1.bf16.msra.mxu0 0
        %2004 = vmatprep.subr.bf16.mxu0 0
        %2005 = vmatpush1.bf16.msra.mxu0 0
        %2006 = vmatprep.subr.bf16.mxu0 0
        %2007 = vmatpush1.bf16.msra.mxu0 0
        %2008 = vmatprep.subr.bf16.mxu0 0
        %2009 = vmatpush1.bf16.msra.mxu0 0
        %2010 = vmatprep.subr.bf16.mxu0 0
        %2011 = vmatpush1.bf16.msra.mxu0 0
        %2012 = vmatprep.subr.bf16.mxu0 0
        %2013 = vmatpush1.bf16.msra.mxu0 0
        %2014 = vmatprep.subr.bf16.mxu0 0
        %2015 = vmatpush1.bf16.msra.mxu0 %v1998
        %2016 = vmatprep.subr.bf16.mxu0 0
        %2017 = vmatpush2.bf16.msra.mxu0 0
        %2018 = vmatprep.subr.bf16.mxu0 0
        %2019 = vmatpush2.bf16.msra.mxu0 0
        %2020 = vmatprep.subr.bf16.mxu0 0
        %2021 = vmatpush2.bf16.msra.mxu0 0
        %2022 = vmatprep.subr.bf16.mxu0 0
        %2023 = vmatpush2.bf16.msra.mxu0 0
        %2024 = vmatprep.subr.bf16.mxu0 0
        %2025 = vmatpush2.bf16.msra.mxu0 0
        %2026 = vmatprep.subr.bf16.mxu0 0
        %2027 = vmatpush2.bf16.msra.mxu0 0
        %2028 = vmatprep.subr.bf16.mxu0 0
        %2029 = vmatpush2.bf16.msra.mxu0 0
        %2030 = vmatprep.subr.bf16.mxu0 0
        %2031 = vmatpush2.bf16.msra.mxu0 0
        %2032 = vmatprep.mubr.bf16.mxu0 0
        %2033 = vmatmul.mubr.bf16.gmra.mxu0 %v1995
        %v2034 = vpop.f32.mrf.mxu0
        %v2035 = vadd.f32 0.0, %v2034
        %v2036 = vpop.f32.mrf.mxu0
        %v2037 = vpop.f32.mrf.mxu0
        %v2038 = vpop.f32.mrf.mxu0
        %2039 = vdwg.mxu0
        %v2040 = vcombine.low %v1897, %v1989
        %v2041 = vcombine.high %v1897, %v1989
        %v2043 = vunpack.c.l.s4 1983009808
        %v2044 = vunpack.c.0.s8 %v2043
        %v2045 = vlaneseq
        %v2046 = vshrl.u32 %v2045, 7
        %v2047 = vsub.s32 %v2044, %v2046
        %v2048 = vrot.slane %v2040, %v2047
        %v2050 = vunpack.c.l.s4 1983009808
        %v2051 = vunpack.c.0.s8 %v2050
        %v2052 = vlaneseq
        %v2053 = vshrl.u32 %v2052, 7
        %v2054 = vsub.s32 %v2051, %v2053
        %v2055 = vrot.slane %v2041, %v2054
        %v2056 = vcombine.low %v1943, %v2035
        %v2057 = vcombine.high %v1943, %v2035
        %v2059 = vunpack.c.l.s4 1983009808
        %v2060 = vunpack.c.0.s8 %v2059
        %v2061 = vlaneseq
        %v2062 = vshrl.u32 %v2061, 7
        %v2063 = vsub.s32 %v2060, %v2062
        %v2064 = vrot.slane %v2056, %v2063
        %v2066 = vunpack.c.l.s4 1983009808
        %v2067 = vunpack.c.0.s8 %v2066
        %v2068 = vlaneseq
        %v2069 = vshrl.u32 %v2068, 7
        %v2070 = vsub.s32 %v2067, %v2069
        %v2071 = vrot.slane %v2057, %v2070
        %v2072 = vcombine.low %v2048, %v2064
        %v2073 = vcombine.high %v2048, %v2064
        %v2075 = vunpack.c.l.s4 1934713408
        %v2076 = vunpack.c.0.s8 %v2075
        %v2077 = vlaneseq
        %v2078 = vshrl.u32 %v2077, 7
        %v2079 = vsub.s32 %v2076, %v2078
        %v2080 = vrot.slane %v2072, %v2079
        %v2082 = vunpack.c.l.s4 1934713408
        %v2083 = vunpack.c.0.s8 %v2082
        %v2084 = vlaneseq
        %v2085 = vshrl.u32 %v2084, 7
        %v2086 = vsub.s32 %v2083, %v2085
        %v2087 = vrot.slane %v2073, %v2086
        %v2088 = vcombine.low %v2055, %v2071
        %v2089 = vcombine.high %v2055, %v2071
        %v2091 = vunpack.c.l.s4 1934713408
        %v2092 = vunpack.c.0.s8 %v2091
        %v2093 = vlaneseq
        %v2094 = vshrl.u32 %v2093, 7
        %v2095 = vsub.s32 %v2092, %v2094
        %v2096 = vrot.slane %v2088, %v2095
        %v2098 = vunpack.c.l.s4 1934713408
        %v2099 = vunpack.c.0.s8 %v2098
        %v2100 = vlaneseq
        %v2101 = vshrl.u32 %v2100, 7
        %v2102 = vsub.s32 %v2099, %v2101
        %v2103 = vrot.slane %v2089, %v2102
        %v2104 = vcombine.high %v2080, 0.0
        %v2105 = vcombine.high %v2087, 0.0
        %v2106 = vcombine.high %v2096, 0.0
        %v2107 = vcombine.high %v2103, 0.0
        %v2108 = vcombine.low %v2080, %v2087
        %v2110 = vunpack.c.l.s4 1983009808
        %v2111 = vunpack.c.0.s8 %v2110
        %v2112 = vlaneseq
        %v2113 = vshrl.u32 %v2112, 7
        %v2114 = vsub.s32 %v2111, %v2113
        %v2115 = vrot.slane %v2108, %v2114
        %v2116 = vcombine.low %v2104, %v2105
        %v2118 = vunpack.c.l.s4 1983009808
        %v2119 = vunpack.c.0.s8 %v2118
        %v2120 = vlaneseq
        %v2121 = vshrl.u32 %v2120, 7
        %v2122 = vsub.s32 %v2119, %v2121
        %v2123 = vrot.slane %v2116, %v2122
        %v2124 = vcombine.low %v2096, %v2103
        %v2126 = vunpack.c.l.s4 1983009808
        %v2127 = vunpack.c.0.s8 %v2126
        %v2128 = vlaneseq
        %v2129 = vshrl.u32 %v2128, 7
        %v2130 = vsub.s32 %v2127, %v2129
        %v2131 = vrot.slane %v2124, %v2130
        %v2132 = vcombine.low %v2106, %v2107
        %v2134 = vunpack.c.l.s4 1983009808
        %v2135 = vunpack.c.0.s8 %v2134
        %v2136 = vlaneseq
        %v2137 = vshrl.u32 %v2136, 7
        %v2138 = vsub.s32 %v2135, %v2137
        %v2139 = vrot.slane %v2132, %v2138
        %v2140 = vcombine.low %v2115, %v2123
        %v2141 = vcombine.high %v2115, %v2123
        %v2143 = vunpack.c.l.s4 1934713408
        %v2144 = vunpack.c.0.s8 %v2143
        %v2145 = vlaneseq
        %v2146 = vshrl.u32 %v2145, 7
        %v2147 = vsub.s32 %v2144, %v2146
        %v2148 = vrot.slane %v2140, %v2147
        %v2150 = vunpack.c.l.s4 1934713408
        %v2151 = vunpack.c.0.s8 %v2150
        %v2152 = vlaneseq
        %v2153 = vshrl.u32 %v2152, 7
        %v2154 = vsub.s32 %v2151, %v2153
        %v2155 = vrot.slane %v2141, %v2154
        %v2156 = vcombine.low %v2131, %v2139
        %v2157 = vcombine.high %v2131, %v2139
        %v2159 = vunpack.c.l.s4 1934713408
        %v2160 = vunpack.c.0.s8 %v2159
        %v2161 = vlaneseq
        %v2162 = vshrl.u32 %v2161, 7
        %v2163 = vsub.s32 %v2160, %v2162
        %v2164 = vrot.slane %v2156, %v2163
        %v2166 = vunpack.c.l.s4 1934713408
        %v2167 = vunpack.c.0.s8 %v2166
        %v2168 = vlaneseq
        %v2169 = vshrl.u32 %v2168, 7
        %v2170 = vsub.s32 %v2167, %v2169
        %v2171 = vrot.slane %v2157, %v2170
        %v2172 = vcombine.low %v2148, %v2164
        %v2173 = vcombine.high %v2148, %v2164
        %v2174 = vcombine.low %v2155, %v2171
        %v2175 = vcombine.high %v2155, %v2171
        %2177 = vrot.lane.b32.xlu0 %v2173, 8
        %v2178 = vpop.permute.xlu0 %2177
        %2181 = vrot.lane.b32.xlu0 %v2174, 16
        %v2182 = vpop.permute.xlu0 %2181
        %2185 = vrot.lane.b32.xlu0 %v2175, 24
        %v2186 = vpop.permute.xlu0 %2185
        %v2188 = vsel %vm1607, %v2172, %v2178
        %vm2189 = vcmask 130048
        %v2190 = vsel %vm2189, %v2188, %v2182
        %vm2191 = vcmask 195584
        %v2192 = vsel %vm2191, %v2190, %v2186
        %v2193 = vpack.c.bf16 %v2192, %v2192
        %v2194 = vld [vmem:[%s865] sm:$0xf]
        %v2195 = vld [vmem:[%s865 + $0x4] sm:$0xf]
        %v2196 = vld [vmem:[%s865 + $0x8] sm:$0xf]
        %v2197 = vld [vmem:[%s865 + $0xc] sm:$0xf]
        %v2198 = vld [vmem:[%s868] sm:$0x1]
        %v2200 = vlaneseq
        %v2201 = vshrl.u32 %v2200, 7
        %v2202 = vsub.s32 0, %v2201
        %v2203 = vrot.slane %v2198, %v2202
        %v2209 = vunpack.c.l.b16 %v2194
        %v2210 = vunpack.c.l.b16 %v2195
        %v2211 = vunpack.c.l.b16 %v2196
        %v2212 = vunpack.c.l.b16 %v2197
        %v2213 = vpack.c.b16 %v2210, %v2209
        %v2214 = vpack.c.b16 %v2212, %v2211
        %v2218 = vsel %vm930, %v2193, 0
        %2220 = vmatprep.subr.bf16.mxu0 0
        %2221 = vmatpush1.bf16.msra.mxu0 0
        %2222 = vmatprep.subr.bf16.mxu0 0
        %2223 = vmatpush1.bf16.msra.mxu0 0
        %2224 = vmatprep.subr.bf16.mxu0 0
        %2225 = vmatpush1.bf16.msra.mxu0 0
        %2226 = vmatprep.subr.bf16.mxu0 0
        %2227 = vmatpush1.bf16.msra.mxu0 0
        %2228 = vmatprep.subr.bf16.mxu0 0
        %2229 = vmatpush1.bf16.msra.mxu0 0
        %2230 = vmatprep.subr.bf16.mxu0 0
        %2231 = vmatpush1.bf16.msra.mxu0 0
        %2232 = vmatprep.subr.bf16.mxu0 0
        %2233 = vmatpush1.bf16.msra.mxu0 %v2214
        %2234 = vmatprep.subr.bf16.mxu0 0
        %2235 = vmatpush1.bf16.msra.mxu0 %v2213
        %2236 = vmatprep.subr.bf16.mxu0 0
        %2237 = vmatpush2.bf16.msra.mxu0 0
        %2238 = vmatprep.subr.bf16.mxu0 0
        %2239 = vmatpush2.bf16.msra.mxu0 0
        %2240 = vmatprep.subr.bf16.mxu0 0
        %2241 = vmatpush2.bf16.msra.mxu0 0
        %2242 = vmatprep.subr.bf16.mxu0 0
        %2243 = vmatpush2.bf16.msra.mxu0 0
        %2244 = vmatprep.subr.bf16.mxu0 0
        %2245 = vmatpush2.bf16.msra.mxu0 0
        %2246 = vmatprep.subr.bf16.mxu0 0
        %2247 = vmatpush2.bf16.msra.mxu0 0
        %2248 = vmatprep.subr.bf16.mxu0 0
        %2249 = vmatpush2.bf16.msra.mxu0 0
        %2250 = vmatprep.subr.bf16.mxu0 0
        %2251 = vmatpush2.bf16.msra.mxu0 0
        %2252 = vmatprep.mubr.bf16.mxu0 0
        %2253 = vmatmul.mubr.bf16.gmra.mxu0 %v2218
        %v2254 = vpop.f32.mrf.mxu0
        %v2255 = vadd.f32 %v2203, %v2254
        %v2256 = vpop.f32.mrf.mxu0
        %v2257 = vpop.f32.mrf.mxu0
        %v2258 = vpop.f32.mrf.mxu0
        %2259 = vdwg.mxu0
        %v2260 = vadd.f32 %v2255, %v905
        %v2261 = vld [vmem:[%s871] sm:$0x1]
        %v2262 = vld [vmem:[%s874] sm:$0x1]
        %v2263 = vsel %vm930, %v2260, 0.0
        %2264 = vadd.xlane.f32.xlu0 %v2263
        %v2265 = vpop.xlane.xlu0 %2264
        %v2266 = vrcp.pop 32.0
        %v2267 = vmul.f32 %v2265, %v2266
        %v2268 = vsub.f32 %v2260, %v2267
        %v2269 = vmul.f32 %v2268, %v2268
        %v2270 = vsel %vm930, %v2269, 0.0
        %2271 = vadd.xlane.f32.xlu0 %v2270
        %v2272 = vpop.xlane.xlu0 %2271
        %v2273 = vmul.f32 %v2272, %v2266
        %v2275 = vlaneseq
        %v2276 = vshrl.u32 %v2275, 7
        %v2277 = vsub.s32 0, %v2276
        %v2278 = vrot.slane %v2261, %v2277
        %v2280 = vmul.f32 %v2278, %v2268
        %v2281 = vadd.f32 %v2273, 1e-06
        %v2282 = vrsqrt.pop %v2281
        %v2283 = vmul.f32 %v2280, %v2282
        %v2285 = vlaneseq
        %v2286 = vshrl.u32 %v2285, 7
        %v2287 = vsub.s32 0, %v2286
        %v2288 = vrot.slane %v2262, %v2287
        %v2290 = vadd.f32 %v2283, %v2288
        %v2291 = vpack.c.bf16 %v2290, %v2290
        %v2292 = vld [vmem:[%s879] sm:$0xf]
        %v2293 = vld [vmem:[%s879 + $0x4] sm:$0xf]
        %v2294 = vld [vmem:[%s879 + $0x8] sm:$0xf]
        %v2295 = vld [vmem:[%s879 + $0xc] sm:$0xf]
        %v2296 = vld [vmem:[%s882] sm:$0x1]
        %v2298 = vlaneseq
        %v2299 = vshrl.u32 %v2298, 7
        %v2300 = vsub.s32 0, %v2299
        %v2301 = vrot.slane %v2296, %v2300
        %v2307 = vunpack.c.l.b16 %v2292
        %v2308 = vunpack.c.l.b16 %v2293
        %v2309 = vunpack.c.l.b16 %v2294
        %v2310 = vunpack.c.l.b16 %v2295
        %v2311 = vpack.c.b16 %v2308, %v2307
        %v2312 = vpack.c.b16 %v2310, %v2309
        %v2316 = vsel %vm930, %v2291, 0
        %2318 = vmatprep.subr.bf16.mxu0 0
        %2319 = vmatpush1.bf16.msra.mxu0 0
        %2320 = vmatprep.subr.bf16.mxu0 0
        %2321 = vmatpush1.bf16.msra.mxu0 0
        %2322 = vmatprep.subr.bf16.mxu0 0
        %2323 = vmatpush1.bf16.msra.mxu0 0
        %2324 = vmatprep.subr.bf16.mxu0 0
        %2325 = vmatpush1.bf16.msra.mxu0 0
        %2326 = vmatprep.subr.bf16.mxu0 0
        %2327 = vmatpush1.bf16.msra.mxu0 0
        %2328 = vmatprep.subr.bf16.mxu0 0
        %2329 = vmatpush1.bf16.msra.mxu0 0
        %2330 = vmatprep.subr.bf16.mxu0 0
        %2331 = vmatpush1.bf16.msra.mxu0 %v2312
        %2332 = vmatprep.subr.bf16.mxu0 0
        %2333 = vmatpush1.bf16.msra.mxu0 %v2311
        %2334 = vmatprep.subr.bf16.mxu0 0
        %2335 = vmatpush2.bf16.msra.mxu0 0
        %2336 = vmatprep.subr.bf16.mxu0 0
        %2337 = vmatpush2.bf16.msra.mxu0 0
        %2338 = vmatprep.subr.bf16.mxu0 0
        %2339 = vmatpush2.bf16.msra.mxu0 0
        %2340 = vmatprep.subr.bf16.mxu0 0
        %2341 = vmatpush2.bf16.msra.mxu0 0
        %2342 = vmatprep.subr.bf16.mxu0 0
        %2343 = vmatpush2.bf16.msra.mxu0 0
        %2344 = vmatprep.subr.bf16.mxu0 0
        %2345 = vmatpush2.bf16.msra.mxu0 0
        %2346 = vmatprep.subr.bf16.mxu0 0
        %2347 = vmatpush2.bf16.msra.mxu0 0
        %2348 = vmatprep.subr.bf16.mxu0 0
        %2349 = vmatpush2.bf16.msra.mxu0 0
        %2350 = vmatprep.mubr.bf16.mxu0 0
        %2351 = vmatmul.mubr.bf16.gmra.mxu0 %v2316
        %v2352 = vpop.f32.mrf.mxu0
        %v2353 = vadd.f32 %v2301, %v2352
        %v2354 = vpop.f32.mrf.mxu0
        %v2355 = vpop.f32.mrf.mxu0
        %v2356 = vpop.f32.mrf.mxu0
        %2357 = vdwg.mxu0
        %v2358 = vmul.f32 %v2353, 0.5
        %v2359 = vmul.f32 %v2353, 0.044715
        %v2360 = vmul.f32 %v2359, %v2353
        %v2361 = vmul.f32 %v2360, %v2353
        %v2362 = vadd.f32 %v2353, %v2361
        %v2363 = vmul.f32 %v2362, 0.7978846
        %v2364 = vtanh.pop %v2363
        %v2365 = vadd.f32 %v2364, 1.0
        %v2366 = vmul.f32 %v2358, %v2365
        %v2367 = vpack.c.bf16 %v2366, %v2366
        %v2368 = vld [vmem:[%s887] sm:$0xf]
        %v2369 = vld [vmem:[%s887 + $0x4] sm:$0xf]
        %v2370 = vld [vmem:[%s887 + $0x8] sm:$0xf]
        %v2371 = vld [vmem:[%s887 + $0xc] sm:$0xf]
        %v2372 = vld [vmem:[%s887 + $0x10] sm:$0xf]
        %v2373 = vld [vmem:[%s887 + $0x14] sm:$0xf]
        %v2374 = vld [vmem:[%s887 + $0x18] sm:$0xf]
        %v2375 = vld [vmem:[%s887 + $0x1c] sm:$0xf]
        %v2376 = vld [vmem:[%s887 + $0x20] sm:$0xf]
        %v2377 = vld [vmem:[%s887 + $0x24] sm:$0xf]
        %v2378 = vld [vmem:[%s887 + $0x28] sm:$0xf]
        %v2379 = vld [vmem:[%s887 + $0x2c] sm:$0xf]
        %v2380 = vld [vmem:[%s887 + $0x30] sm:$0xf]
        %v2381 = vld [vmem:[%s887 + $0x34] sm:$0xf]
        %v2382 = vld [vmem:[%s887 + $0x38] sm:$0xf]
        %v2383 = vld [vmem:[%s887 + $0x3c] sm:$0xf]
        %v2384 = vld [vmem:[%s890] sm:$0x1]
        %v2386 = vlaneseq
        %v2387 = vshrl.u32 %v2386, 7
        %v2388 = vsub.s32 0, %v2387
        %v2389 = vrot.slane %v2384, %v2388
        %v2407 = vunpack.c.l.b16 %v2368
        %v2408 = vunpack.c.l.b16 %v2369
        %v2409 = vunpack.c.l.b16 %v2370
        %v2410 = vunpack.c.l.b16 %v2371
        %v2411 = vunpack.c.l.b16 %v2372
        %v2412 = vunpack.c.l.b16 %v2373
        %v2413 = vunpack.c.l.b16 %v2374
        %v2414 = vunpack.c.l.b16 %v2375
        %v2415 = vunpack.c.l.b16 %v2376
        %v2416 = vunpack.c.l.b16 %v2377
        %v2417 = vunpack.c.l.b16 %v2378
        %v2418 = vunpack.c.l.b16 %v2379
        %v2419 = vunpack.c.l.b16 %v2380
        %v2420 = vunpack.c.l.b16 %v2381
        %v2421 = vunpack.c.l.b16 %v2382
        %v2422 = vunpack.c.l.b16 %v2383
        %v2423 = vpack.c.b16 %v2408, %v2407
        %v2424 = vpack.c.b16 %v2410, %v2409
        %v2425 = vpack.c.b16 %v2412, %v2411
        %v2426 = vpack.c.b16 %v2414, %v2413
        %v2427 = vpack.c.b16 %v2416, %v2415
        %v2428 = vpack.c.b16 %v2418, %v2417
        %v2429 = vpack.c.b16 %v2420, %v2419
        %v2430 = vpack.c.b16 %v2422, %v2421
        %2439 = vmatprep.subr.bf16.mxu0 0
        %2440 = vmatpush1.bf16.msra.mxu0 %v2430
        %2441 = vmatprep.subr.bf16.mxu0 0
        %2442 = vmatpush1.bf16.msra.mxu0 %v2429
        %2443 = vmatprep.subr.bf16.mxu0 0
        %2444 = vmatpush1.bf16.msra.mxu0 %v2428
        %2445 = vmatprep.subr.bf16.mxu0 0
        %2446 = vmatpush1.bf16.msra.mxu0 %v2427
        %2447 = vmatprep.subr.bf16.mxu0 0
        %2448 = vmatpush1.bf16.msra.mxu0 %v2426
        %2449 = vmatprep.subr.bf16.mxu0 0
        %2450 = vmatpush1.bf16.msra.mxu0 %v2425
        %2451 = vmatprep.subr.bf16.mxu0 0
        %2452 = vmatpush1.bf16.msra.mxu0 %v2424
        %2453 = vmatprep.subr.bf16.mxu0 0
        %2454 = vmatpush1.bf16.msra.mxu0 %v2423
        %2455 = vmatprep.subr.bf16.mxu0 0
        %2456 = vmatpush2.bf16.msra.mxu0 0
        %2457 = vmatprep.subr.bf16.mxu0 0
        %2458 = vmatpush2.bf16.msra.mxu0 0
        %2459 = vmatprep.subr.bf16.mxu0 0
        %2460 = vmatpush2.bf16.msra.mxu0 0
        %2461 = vmatprep.subr.bf16.mxu0 0
        %2462 = vmatpush2.bf16.msra.mxu0 0
        %2463 = vmatprep.subr.bf16.mxu0 0
        %2464 = vmatpush2.bf16.msra.mxu0 0
        %2465 = vmatprep.subr.bf16.mxu0 0
        %2466 = vmatpush2.bf16.msra.mxu0 0
        %2467 = vmatprep.subr.bf16.mxu0 0
        %2468 = vmatpush2.bf16.msra.mxu0 0
        %2469 = vmatprep.subr.bf16.mxu0 0
        %2470 = vmatpush2.bf16.msra.mxu0 0
        %2471 = vmatprep.mubr.bf16.mxu0 0
        %2472 = vmatmul.mubr.bf16.gmra.mxu0 %v2367
        %v2473 = vpop.f32.mrf.mxu0
        %v2474 = vadd.f32 %v2389, %v2473
        %v2475 = vpop.f32.mrf.mxu0
        %v2476 = vpop.f32.mrf.mxu0
        %v2477 = vpop.f32.mrf.mxu0
        %2478 = vdwg.mxu0
        %v2479 = vadd.f32 %v2474, %v2290
        %v2480 = vld [vmem:[%s893] sm:$0x1]
        %v2481 = vld [vmem:[%s896] sm:$0x1]
        %v2482 = vsel %vm930, %v2479, 0.0
        %2483 = vadd.xlane.f32.xlu0 %v2482
        %v2484 = vpop.xlane.xlu0 %2483
        %v2485 = vmul.f32 %v2484, %v2266
        %v2486 = vsub.f32 %v2479, %v2485
        %v2487 = vmul.f32 %v2486, %v2486
        %v2488 = vsel %vm930, %v2487, 0.0
        %2489 = vadd.xlane.f32.xlu0 %v2488
        %v2490 = vpop.xlane.xlu0 %2489
        %v2491 = vmul.f32 %v2490, %v2266
        %v2493 = vlaneseq
        %v2494 = vshrl.u32 %v2493, 7
        %v2495 = vsub.s32 0, %v2494
        %v2496 = vrot.slane %v2480, %v2495
        %v2498 = vmul.f32 %v2496, %v2486
        %v2499 = vadd.f32 %v2491, 1e-06
        %v2500 = vrsqrt.pop %v2499
        %v2501 = vmul.f32 %v2498, %v2500
        %v2503 = vlaneseq
        %v2504 = vshrl.u32 %v2503, 7
        %v2505 = vsub.s32 0, %v2504
        %v2506 = vrot.slane %v2481, %v2505
        %v2508 = vadd.f32 %v2501, %v2506
        %2509 = vst.msk [vmem:[%s836] sm:$0xff] %vm930, %v2508
        %s2510 = sand.u32 %s526, 1
        %s2511 = scalar_lea.sflag [#allocation4], %s2510
        %s2512 = sand.u32 %s526, 1
        %s2513 = smul.addr %s2512, 8
        %s2514 = scalar_lea.vmem [#allocation7], %s2513
        // Predicated region
        $region105: #{tpu_custom_call.1} parent=91 // pred_check
          %p2515 = pneg %p536
        $region106: #{tpu_custom_call.1} parent=91 // pred_check_branch
          %2517 = sbr.rel (%p2515) target = $region108
        $region107: #{tpu_custom_call.1} parent=91 // pred_region
          %s2519 = ssub.s32 128, 128
          %2520 = vsyncadd %s2511, %s2519
          %s2521 = smul.addr %s42, 128
          %s2522 = scalar_lea.hbm %s18, %s2521
          %s2524 = sshll.u32 %s2514, 4
          %s2525 = int_to_ptr.vmem [resolvable:$true] %s2524
          %2527 = dma.vmem_to_hbm [thread:$0]  %s2525, 128, %s2522, %s2511
        $region108: #{tpu_custom_call.1} parent=91 // pred_fallthru
          _
      $region92: #{tpu_custom_call.1} parent=5 // pred_fallthru
        _
      %p2528 = scmp.le.s32.totalorder 2, %s33
      // Predicated region
      $region109: #{tpu_custom_call.1} parent=5 // pred_check
        %p2529 = pneg %p2528
      $region110: #{tpu_custom_call.1} parent=5 // pred_check_branch
        %2531 = sbr.rel (%p2529) target = $region112
      $region111: #{tpu_custom_call.1} parent=5 // pred_region
        %s2532 = ssub.s32 %s33, 2
        // Predicated region
        $region113: #{tpu_custom_call.1} parent=111 // pred_check
          %p2533 = pneg %p542
        $region114: #{tpu_custom_call.1} parent=111 // pred_check_branch
          %2535 = sbr.rel (%p2533) target = $region116
        $region115: #{tpu_custom_call.1} parent=111 // pred_region
          %s2536 = sand.u32 %s527, 1
          %s2537 = scalar_lea.sflag [#allocation4], %s2536
          %s2538 = sand.u32 %s527, 1
          %s2539 = smul.addr %s2538, 8
          %s2540 = scalar_lea.vmem [#allocation7], %s2539
          %2541 = dma.done %s2537, 128
        $region116: #{tpu_custom_call.1} parent=111 // pred_fallthru
          _
      $region112: #{tpu_custom_call.1} parent=5 // pred_fallthru
        _
    $region6: #{tpu_custom_call.1} parent=1 // loop_footer
      %s37 = sadd.s32 1, %s33
    $region7: #{tpu_custom_call.1} parent=1 // loop_footer_branch
      %32 = sbr.rel target = $region3
    $region8: #{tpu_custom_call.1} parent=1 // loop_exit
      _
    %2542 = vsyncpa [#allocation3], 1
    %s2543 = scalar_lea.sflag [#allocation3], 1
    %2544 = vsyncpa %s2543, 1
    %2545 = vsyncpa [#allocation6], 1
    %s2546 = scalar_lea.sflag [#allocation6], 1
    %2547 = vsyncpa %s2546, 1
    %2548 = vsyncpa [#allocation4], 1
    %s2549 = scalar_lea.sflag [#allocation4], 1
    %2550 = vsyncpa %s2549, 1

</llo_original>
